<compile_context>
chip_gen: v7x
topology: tpu7x:2x2x1
jax: 0.10.0
libtpu: 0.0.40
codegen_flags: <defaults>
</compile_context>

<pallas_src>
import functools

import jax
import jax.numpy as jnp
from jax.experimental import pallas as pl
from jax.experimental.pallas import tpu as pltpu  # noqa: F401  (TPU backend)


HP = 128          # lane-aligned per-gate / per-feature block width (H padded to HP)
LOGITS_PAD = 128  # lane-dense logits output width; sliced to n_classes outside


# ----------------------------------------------------------------------------
# Single fused kernel: input projection + masked recurrence + max-pool + head
# ----------------------------------------------------------------------------
def nli_fused_kernel(x_ref, m_ref,
                     wx3_ref, wh3_ref, b3_ref,
                     w1_ref, b1_ref, w2_ref, b2_ref,
                     o_ref, *, seq_len, n_rows, d_hidden):
    """x_ref: (L*N, D) bf16 time-major embeddings; m_ref: (L*N, 1) f32 masks."""
    L, N, H = seq_len, n_rows, d_hidden

    # ---- Prologue: everything x-dependent hoisted off the serial chain -----
    # One matmul for all timesteps; gate g occupies lanes [g*HP, g*HP + H).
    xp = (jnp.dot(x_ref[...], wx3_ref[...],
                  preferred_element_type=jnp.float32) + b3_ref[...])  # (L*N, 3*HP) f32

    # Mask broadcast + compare hoisted out of the recurrence (not h-dependent).
    keep_all = jnp.broadcast_to(m_ref[...], (L * N, HP)) > 0.0        # (L*N, HP) bool

    # Packed recurrent weight read ONCE -> loop-invariant MXU operand.
    wh3 = wh3_ref[...]                                                # (HP, 3*HP) bf16

    neg_inf = jnp.float32(-jnp.inf)
    h = jnp.zeros((N, HP), jnp.float32)                # frozen h0 == zeros; padded lanes stay 0
    run_max = jnp.full((N, HP), neg_inf, jnp.float32)  # fused rep_pooling('max')

    # Short fixed trip count -> fully unrolled; all slices below are static.
    # TODO(synk): switch to lax.fori_loop(unroll=k) for larger L to bound live ranges.
    for t in range(L):
        row = t * N
        xp_t = xp[row:row + N, :]                      # (N, 3*HP)
        keep_t = keep_all[row:row + N, :]              # (N, HP)

        # ONE h-dependent MXU push per step: h @ [Whz|Whr|Whn].
        hg = jnp.dot(h.astype(jnp.bfloat16), wh3,
                     preferred_element_type=jnp.float32)              # (N, 3*HP)

        # Fused z/r sigmoid (single EUP stream); slices are lane-aligned.
        zr = jax.nn.sigmoid(xp_t[:, :2 * HP] + hg[:, :2 * HP])
        z = zr[:, :HP]
        r = zr[:, HP:]
        n = jnp.tanh(xp_t[:, 2 * HP:] + r * hg[:, 2 * HP:])
        h_new = (1.0 - z) * n + z * h

        # Mask handling via selects (no (1-m) blends, no per-step broadcast).
        h = jnp.where(keep_t, h_new, h)                # freeze state at padded steps
        out_t = jnp.where(keep_t, h, 0.0)              # zero outputs at padded steps
        # rep_pooling('max'): masked_fill(out == 0, -inf), max over time
        # (x == 0 sentinel kept faithful to the PyTorch reference).
        run_max = jnp.maximum(run_max, jnp.where(out_t == 0.0, neg_inf, out_t))

    # Zero the padded lanes (>= H) so the -inf sentinel never reaches the MXU.
    lane = jax.lax.broadcasted_iota(jnp.int32, (N, HP), 1)
    feats = jnp.where(lane < H, run_max, 0.0)

    # ---- Classifier head: single (B, 4*HP) @ (4*HP, HP) matmul -------------
    B = N // 2
    u = feats[:B, :]
    v = feats[B:, :]
    uv = jnp.concatenate([u, v, jnp.abs(u - v), u * v], axis=1)       # (B, 4*HP), lane-aligned
    hid = (jnp.dot(uv.astype(jnp.bfloat16), w1_ref[...],
                   preferred_element_type=jnp.float32) + b1_ref[...])
    hid = jnp.maximum(hid, 0.0)
    o_ref[...] = (jnp.dot(hid.astype(jnp.bfloat16), w2_ref[...],
                          preferred_element_type=jnp.float32)
                  + b2_ref[...])                                      # (B, LOGITS_PAD) lane-dense


# ----------------------------------------------------------------------------
# Forward pass: gather in XLA, everything else in the single fused kernel
# ----------------------------------------------------------------------------
@functools.partial(jax.jit, static_argnames=("n_classes",))
def forward(params, t_pre, t_hypo, mask_pre, mask_hypo, *, n_classes):
    B, L = t_pre.shape
    N = 2 * B
    H = params["h0"].shape[-1]

    # wemb = embed(cat([t_pre, t_hypo], 0)); masks = cat([mask_pre, mask_hypo], 0)
    tok = jnp.concatenate([t_pre, t_hypo], axis=0)            # (N, L) int32
    masks = jnp.concatenate([mask_pre, mask_hypo], axis=0)    # (N, L) f32

    # Time-major-flattened gather: produces exactly the kernel's layout (only
    # the tiny token / mask matrices are transposed, never the embedded tensor).
    tok_tm = tok.T.reshape(-1)                                # (L*N,)
    x_tm = jnp.take(params["embed"], tok_tm, axis=0).astype(jnp.bfloat16)  # (L*N, D)
    m_tm = masks.T.reshape(L * N, 1)                          # (L*N, 1) f32

    # TODO(synk): the original also builds `indices` (end-of-sequence markers)
    # for TPRULayer; the GRU-style approximation does not consume them.

    kernel = functools.partial(nli_fused_kernel, seq_len=L, n_rows=N, d_hidden=H)
    logits_pad = pl.pallas_call(
        kernel,
        out_shape=jax.ShapeDtypeStruct((B, LOGITS_PAD), jnp.float32),
    )(x_tm, m_tm,
      params["wx3"], params["wh3"], params["b3"],
      params["w1"], params["b1"],
      params["w2"], params["b2"])
    return logits_pad[:, :n_classes]


# ----------------------------------------------------------------------------
# Deterministic parameter init: weights pre-packed / pre-padded for the kernel
# ----------------------------------------------------------------------------
def init_params(key, n_embed, d_embed, d_hidden, n_classes):
    ks = jax.random.split(key, 12)
    s = 0.1
    H = d_hidden

    embed = s * jax.random.normal(ks[0], (n_embed, d_embed), jnp.float32)
    embed = embed.at[0].set(0.0)                              # padding_idx=0

    def lane_block_pack(mats, rows):
        # Pack matrices into lane-aligned 128-wide column blocks (zeros elsewhere).
        out = jnp.zeros((rows, len(mats) * HP), jnp.float32)
        for g, m in enumerate(mats):
            out = out.at[:m.shape[0], g * HP:g * HP + m.shape[1]].set(m)
        return out

    wxz = s * jax.random.normal(ks[1], (d_embed, H), jnp.float32)
    wxr = s * jax.random.normal(ks[2], (d_embed, H), jnp.float32)
    wxn = s * jax.random.normal(ks[3], (d_embed, H), jnp.float32)
    whz = s * jax.random.normal(ks[4], (H, H), jnp.float32)
    whr = s * jax.random.normal(ks[5], (H, H), jnp.float32)
    whn = s * jax.random.normal(ks[6], (H, H), jnp.float32)

    # Classifier: W1 blocks for [u, v, |u-v|, u*v] stacked on the contraction
    # axis at 128-row boundaries -> single matmul in-kernel; W2 pre-padded to
    # a lane-dense (HP, LOGITS_PAD) so no per-call jnp.pad.
    w1u = s * jax.random.normal(ks[7], (H, H), jnp.float32)
    w1v = s * jax.random.normal(ks[8], (H, H), jnp.float32)
    w1d = s * jax.random.normal(ks[9], (H, H), jnp.float32)
    w1p = s * jax.random.normal(ks[10], (H, H), jnp.float32)
    w1 = jnp.zeros((4 * HP, HP), jnp.float32)
    for g, m in enumerate([w1u, w1v, w1d, w1p]):
        w1 = w1.at[g * HP:g * HP + H, :H].set(m)
    w2 = s * jax.random.normal(ks[11], (H, n_classes), jnp.float32)
    w2p = jnp.zeros((HP, LOGITS_PAD), jnp.float32).at[:H, :n_classes].set(w2)

    return {
        "embed": embed,                                               # f32 table
        # Packed + lane-aligned recurrent weights, bf16 MXU operands.
        "wx3": lane_block_pack([wxz, wxr, wxn], d_embed).astype(jnp.bfloat16),  # (D, 3*HP)
        "wh3": lane_block_pack([whz, whr, whn], HP).astype(jnp.bfloat16),       # (HP, 3*HP)
        "b3": jnp.zeros((1, 3 * HP), jnp.float32),                    # [bz|br|bn] (padded)
        "w1": w1.astype(jnp.bfloat16),                                # (4*HP, HP)
        "b1": jnp.zeros((1, HP), jnp.float32),
        "w2": w2p.astype(jnp.bfloat16),                               # (HP, LOGITS_PAD)
        "b2": jnp.zeros((1, LOGITS_PAD), jnp.float32),
        # frozen h0 (all zeros); also carries the real d_hidden for the wrapper.
        "h0": jnp.zeros((1, 1, H), jnp.float32),
    }


if __name__ == "__main__":
    # config: n_embed=32 (vocab), d_embed=16, d_hidden=32, n_layers=1,
    #         bidirectional=False, elmo=False, pooling='max', n_classes=3
    B, L = 2, 8
    VOCAB, D, H, C = 32, 16, 32, 3

    key = jax.random.PRNGKey(0)
    kp, kt1, kt2 = jax.random.split(key, 3)
    params = init_params(kp, VOCAB, D, H, C)

    lens_pre = jnp.array([8, 5], jnp.int32)
    lens_hypo = jnp.array([6, 8], jnp.int32)
    pos = jnp.arange(L)[None, :]
    mask_pre = (pos < lens_pre[:, None]).astype(jnp.float32)     # (B, L)
    mask_hypo = (pos < lens_hypo[:, None]).astype(jnp.float32)   # (B, L)

    t_pre = jax.random.randint(kt1, (B, L), 1, VOCAB, jnp.int32) * mask_pre.astype(jnp.int32)
    t_hypo = jax.random.randint(kt2, (B, L), 1, VOCAB, jnp.int32) * mask_hypo.astype(jnp.int32)

    pred = forward(params, t_pre, t_hypo, mask_pre, mask_hypo, n_classes=C)
    jax.block_until_ready(pred)
    assert pred.shape == (B, C) and pred.dtype == jnp.float32
    assert bool(jnp.all(jnp.isfinite(pred)))
    print("KERNEL_OK")
</pallas_src>

<mosaic_0001>
module attributes {stable_mosaic.version = 11 : i64} {
  func.func @nli_fused_kernel(%arg0: memref<32x16xbf16, #tpu.memory_space<vmem>>, %arg1: memref<32x1xf32, #tpu.memory_space<vmem>>, %arg2: memref<16x384xbf16, #tpu.memory_space<vmem>>, %arg3: memref<128x384xbf16, #tpu.memory_space<vmem>>, %arg4: memref<1x384xf32, #tpu.memory_space<vmem>>, %arg5: memref<512x128xbf16, #tpu.memory_space<vmem>>, %arg6: memref<1x128xf32, #tpu.memory_space<vmem>>, %arg7: memref<128x128xbf16, #tpu.memory_space<vmem>>, %arg8: memref<1x128xf32, #tpu.memory_space<vmem>>, %arg9: memref<2x128xf32, #tpu.memory_space<vmem>>) attributes {dimension_semantics = [], scalar_prefetch = 0 : i64, scratch_operands = 0 : i64, tpu.core_type = #tpu.core_type<tc>} {
    %c0 = arith.constant 0 : index
    %c0_0 = arith.constant 0 : index
    %0 = vector.load %arg0[%c0, %c0_0] : memref<32x16xbf16, #tpu.memory_space<vmem>>, vector<32x16xbf16>
    %c0_1 = arith.constant 0 : index
    %c0_2 = arith.constant 0 : index
    %1 = vector.load %arg2[%c0_1, %c0_2] : memref<16x384xbf16, #tpu.memory_space<vmem>>, vector<16x384xbf16>
    %cst = arith.constant dense<0.000000e+00> : vector<32x384xf32>
    %2 = tpu.matmul %0, %1, %cst {dimension_numbers = #tpu.dot_dimension_numbers<[1], [0], [0], [1], [0, 0, 1, 1], [], []>} : vector<32x16xbf16>, vector<16x384xbf16>, vector<32x384xf32> -> vector<32x384xf32>
    %c0_3 = arith.constant 0 : index
    %c0_4 = arith.constant 0 : index
    %3 = vector.load %arg4[%c0_3, %c0_4] : memref<1x384xf32, #tpu.memory_space<vmem>>, vector<1x384xf32>
    %4 = vector.broadcast %3 : vector<1x384xf32> to vector<32x384xf32>
    %5 = arith.addf %2, %4 : vector<32x384xf32>
    %c0_5 = arith.constant 0 : index
    %c0_6 = arith.constant 0 : index
    %6 = vector.load %arg1[%c0_5, %c0_6] : memref<32x1xf32, #tpu.memory_space<vmem>>, vector<32x1xf32>
    %7 = vector.shape_cast %6 : vector<32x1xf32> to vector<32x1xf32>
    %8 = vector.broadcast %7 : vector<32x1xf32> to vector<32x128xf32>
    %cst_7 = arith.constant 0.000000e+00 : f32
    %9 = vector.broadcast %cst_7 : f32 to vector<32x128xf32>
    %10 = arith.cmpf ogt, %8, %9 : vector<32x128xf32>
    %c0_8 = arith.constant 0 : index
    %c0_9 = arith.constant 0 : index
    %11 = vector.load %arg3[%c0_8, %c0_9] : memref<128x384xbf16, #tpu.memory_space<vmem>>, vector<128x384xbf16>
    %cst_10 = arith.constant 0.000000e+00 : f32
    %12 = vector.broadcast %cst_10 : f32 to vector<4x128xf32>
    %cst_11 = arith.constant 0xFF800000 : f32
    %13 = vector.broadcast %cst_11 : f32 to vector<4x128xf32>
    %14 = vector.extract_strided_slice %5 {offsets = [0, 0], sizes = [4, 384], strides = [1, 1]} : vector<32x384xf32> to vector<4x384xf32>
    %15 = vector.extract_strided_slice %10 {offsets = [0, 0], sizes = [4, 128], strides = [1, 1]} : vector<32x128xi1> to vector<4x128xi1>
    %16 = arith.truncf %12 : vector<4x128xf32> to vector<4x128xbf16>
    %cst_12 = arith.constant dense<0.000000e+00> : vector<4x384xf32>
    %17 = tpu.matmul %16, %11, %cst_12 {dimension_numbers = #tpu.dot_dimension_numbers<[1], [0], [0], [1], [0, 0, 1, 1], [], []>} : vector<4x128xbf16>, vector<128x384xbf16>, vector<4x384xf32> -> vector<4x384xf32>
    %18 = vector.extract_strided_slice %14 {offsets = [0, 0], sizes = [4, 256], strides = [1, 1]} : vector<4x384xf32> to vector<4x256xf32>
    %19 = vector.extract_strided_slice %17 {offsets = [0, 0], sizes = [4, 256], strides = [1, 1]} : vector<4x384xf32> to vector<4x256xf32>
    %20 = arith.addf %18, %19 : vector<4x256xf32>
    %21 = arith.negf %20 : vector<4x256xf32>
    %22 = math.exp %21 : vector<4x256xf32>
    %cst_13 = arith.constant 1.000000e+00 : f32
    %23 = vector.broadcast %cst_13 : f32 to vector<4x256xf32>
    %24 = arith.addf %23, %22 : vector<4x256xf32>
    %25 = arith.divf %23, %24 : vector<4x256xf32>
    %26 = vector.extract_strided_slice %25 {offsets = [0, 0], sizes = [4, 128], strides = [1, 1]} : vector<4x256xf32> to vector<4x128xf32>
    %27 = vector.extract_strided_slice %25 {offsets = [0, 128], sizes = [4, 128], strides = [1, 1]} : vector<4x256xf32> to vector<4x128xf32>
    %28 = vector.extract_strided_slice %14 {offsets = [0, 256], sizes = [4, 128], strides = [1, 1]} : vector<4x384xf32> to vector<4x128xf32>
    %29 = vector.extract_strided_slice %17 {offsets = [0, 256], sizes = [4, 128], strides = [1, 1]} : vector<4x384xf32> to vector<4x128xf32>
    %30 = arith.mulf %27, %29 : vector<4x128xf32>
    %31 = arith.addf %28, %30 : vector<4x128xf32>
    %32 = math.tanh %31 : vector<4x128xf32>
    %cst_14 = arith.constant 1.000000e+00 : f32
    %33 = vector.broadcast %cst_14 : f32 to vector<4x128xf32>
    %34 = arith.subf %33, %26 : vector<4x128xf32>
    %35 = arith.mulf %34, %32 : vector<4x128xf32>
    %36 = arith.mulf %26, %12 : vector<4x128xf32>
    %37 = arith.addf %35, %36 : vector<4x128xf32>
    %38 = arith.select %15, %37, %12 : vector<4x128xi1>, vector<4x128xf32>
    %cst_15 = arith.constant 0.000000e+00 : f32
    %39 = vector.broadcast %cst_15 : f32 to vector<4x128xf32>
    %40 = arith.select %15, %38, %39 : vector<4x128xi1>, vector<4x128xf32>
    %cst_16 = arith.constant 0.000000e+00 : f32
    %41 = vector.broadcast %cst_16 : f32 to vector<4x128xf32>
    %42 = arith.cmpf oeq, %40, %41 : vector<4x128xf32>
    %cst_17 = arith.constant 0xFF800000 : f32
    %43 = vector.broadcast %cst_17 : f32 to vector<4x128xf32>
    %44 = arith.select %42, %43, %40 : vector<4x128xi1>, vector<4x128xf32>
    %45 = arith.maximumf %13, %44 : vector<4x128xf32>
    %46 = vector.extract_strided_slice %5 {offsets = [4, 0], sizes = [4, 384], strides = [1, 1]} : vector<32x384xf32> to vector<4x384xf32>
    %47 = vector.extract_strided_slice %10 {offsets = [4, 0], sizes = [4, 128], strides = [1, 1]} : vector<32x128xi1> to vector<4x128xi1>
    %48 = arith.truncf %38 : vector<4x128xf32> to vector<4x128xbf16>
    %cst_18 = arith.constant dense<0.000000e+00> : vector<4x384xf32>
    %49 = tpu.matmul %48, %11, %cst_18 {dimension_numbers = #tpu.dot_dimension_numbers<[1], [0], [0], [1], [0, 0, 1, 1], [], []>} : vector<4x128xbf16>, vector<128x384xbf16>, vector<4x384xf32> -> vector<4x384xf32>
    %50 = vector.extract_strided_slice %46 {offsets = [0, 0], sizes = [4, 256], strides = [1, 1]} : vector<4x384xf32> to vector<4x256xf32>
    %51 = vector.extract_strided_slice %49 {offsets = [0, 0], sizes = [4, 256], strides = [1, 1]} : vector<4x384xf32> to vector<4x256xf32>
    %52 = arith.addf %50, %51 : vector<4x256xf32>
    %53 = arith.negf %52 : vector<4x256xf32>
    %54 = math.exp %53 : vector<4x256xf32>
    %cst_19 = arith.constant 1.000000e+00 : f32
    %55 = vector.broadcast %cst_19 : f32 to vector<4x256xf32>
    %56 = arith.addf %55, %54 : vector<4x256xf32>
    %57 = arith.divf %55, %56 : vector<4x256xf32>
    %58 = vector.extract_strided_slice %57 {offsets = [0, 0], sizes = [4, 128], strides = [1, 1]} : vector<4x256xf32> to vector<4x128xf32>
    %59 = vector.extract_strided_slice %57 {offsets = [0, 128], sizes = [4, 128], strides = [1, 1]} : vector<4x256xf32> to vector<4x128xf32>
    %60 = vector.extract_strided_slice %46 {offsets = [0, 256], sizes = [4, 128], strides = [1, 1]} : vector<4x384xf32> to vector<4x128xf32>
    %61 = vector.extract_strided_slice %49 {offsets = [0, 256], sizes = [4, 128], strides = [1, 1]} : vector<4x384xf32> to vector<4x128xf32>
    %62 = arith.mulf %59, %61 : vector<4x128xf32>
    %63 = arith.addf %60, %62 : vector<4x128xf32>
    %64 = math.tanh %63 : vector<4x128xf32>
    %cst_20 = arith.constant 1.000000e+00 : f32
    %65 = vector.broadcast %cst_20 : f32 to vector<4x128xf32>
    %66 = arith.subf %65, %58 : vector<4x128xf32>
    %67 = arith.mulf %66, %64 : vector<4x128xf32>
    %68 = arith.mulf %58, %38 : vector<4x128xf32>
    %69 = arith.addf %67, %68 : vector<4x128xf32>
    %70 = arith.select %47, %69, %38 : vector<4x128xi1>, vector<4x128xf32>
    %cst_21 = arith.constant 0.000000e+00 : f32
    %71 = vector.broadcast %cst_21 : f32 to vector<4x128xf32>
    %72 = arith.select %47, %70, %71 : vector<4x128xi1>, vector<4x128xf32>
    %cst_22 = arith.constant 0.000000e+00 : f32
    %73 = vector.broadcast %cst_22 : f32 to vector<4x128xf32>
    %74 = arith.cmpf oeq, %72, %73 : vector<4x128xf32>
    %cst_23 = arith.constant 0xFF800000 : f32
    %75 = vector.broadcast %cst_23 : f32 to vector<4x128xf32>
    %76 = arith.select %74, %75, %72 : vector<4x128xi1>, vector<4x128xf32>
    %77 = arith.maximumf %45, %76 : vector<4x128xf32>
    %78 = vector.extract_strided_slice %5 {offsets = [8, 0], sizes = [4, 384], strides = [1, 1]} : vector<32x384xf32> to vector<4x384xf32>
    %79 = vector.extract_strided_slice %10 {offsets = [8, 0], sizes = [4, 128], strides = [1, 1]} : vector<32x128xi1> to vector<4x128xi1>
    %80 = arith.truncf %70 : vector<4x128xf32> to vector<4x128xbf16>
    %cst_24 = arith.constant dense<0.000000e+00> : vector<4x384xf32>
    %81 = tpu.matmul %80, %11, %cst_24 {dimension_numbers = #tpu.dot_dimension_numbers<[1], [0], [0], [1], [0, 0, 1, 1], [], []>} : vector<4x128xbf16>, vector<128x384xbf16>, vector<4x384xf32> -> vector<4x384xf32>
    %82 = vector.extract_strided_slice %78 {offsets = [0, 0], sizes = [4, 256], strides = [1, 1]} : vector<4x384xf32> to vector<4x256xf32>
    %83 = vector.extract_strided_slice %81 {offsets = [0, 0], sizes = [4, 256], strides = [1, 1]} : vector<4x384xf32> to vector<4x256xf32>
    %84 = arith.addf %82, %83 : vector<4x256xf32>
    %85 = arith.negf %84 : vector<4x256xf32>
    %86 = math.exp %85 : vector<4x256xf32>
    %cst_25 = arith.constant 1.000000e+00 : f32
    %87 = vector.broadcast %cst_25 : f32 to vector<4x256xf32>
    %88 = arith.addf %87, %86 : vector<4x256xf32>
    %89 = arith.divf %87, %88 : vector<4x256xf32>
    %90 = vector.extract_strided_slice %89 {offsets = [0, 0], sizes = [4, 128], strides = [1, 1]} : vector<4x256xf32> to vector<4x128xf32>
    %91 = vector.extract_strided_slice %89 {offsets = [0, 128], sizes = [4, 128], strides = [1, 1]} : vector<4x256xf32> to vector<4x128xf32>
    %92 = vector.extract_strided_slice %78 {offsets = [0, 256], sizes = [4, 128], strides = [1, 1]} : vector<4x384xf32> to vector<4x128xf32>
    %93 = vector.extract_strided_slice %81 {offsets = [0, 256], sizes = [4, 128], strides = [1, 1]} : vector<4x384xf32> to vector<4x128xf32>
    %94 = arith.mulf %91, %93 : vector<4x128xf32>
    %95 = arith.addf %92, %94 : vector<4x128xf32>
    %96 = math.tanh %95 : vector<4x128xf32>
    %cst_26 = arith.constant 1.000000e+00 : f32
    %97 = vector.broadcast %cst_26 : f32 to vector<4x128xf32>
    %98 = arith.subf %97, %90 : vector<4x128xf32>
    %99 = arith.mulf %98, %96 : vector<4x128xf32>
    %100 = arith.mulf %90, %70 : vector<4x128xf32>
    %101 = arith.addf %99, %100 : vector<4x128xf32>
    %102 = arith.select %79, %101, %70 : vector<4x128xi1>, vector<4x128xf32>
    %cst_27 = arith.constant 0.000000e+00 : f32
    %103 = vector.broadcast %cst_27 : f32 to vector<4x128xf32>
    %104 = arith.select %79, %102, %103 : vector<4x128xi1>, vector<4x128xf32>
    %cst_28 = arith.constant 0.000000e+00 : f32
    %105 = vector.broadcast %cst_28 : f32 to vector<4x128xf32>
    %106 = arith.cmpf oeq, %104, %105 : vector<4x128xf32>
    %cst_29 = arith.constant 0xFF800000 : f32
    %107 = vector.broadcast %cst_29 : f32 to vector<4x128xf32>
    %108 = arith.select %106, %107, %104 : vector<4x128xi1>, vector<4x128xf32>
    %109 = arith.maximumf %77, %108 : vector<4x128xf32>
    %110 = vector.extract_strided_slice %5 {offsets = [12, 0], sizes = [4, 384], strides = [1, 1]} : vector<32x384xf32> to vector<4x384xf32>
    %111 = vector.extract_strided_slice %10 {offsets = [12, 0], sizes = [4, 128], strides = [1, 1]} : vector<32x128xi1> to vector<4x128xi1>
    %112 = arith.truncf %102 : vector<4x128xf32> to vector<4x128xbf16>
    %cst_30 = arith.constant dense<0.000000e+00> : vector<4x384xf32>
    %113 = tpu.matmul %112, %11, %cst_30 {dimension_numbers = #tpu.dot_dimension_numbers<[1], [0], [0], [1], [0, 0, 1, 1], [], []>} : vector<4x128xbf16>, vector<128x384xbf16>, vector<4x384xf32> -> vector<4x384xf32>
    %114 = vector.extract_strided_slice %110 {offsets = [0, 0], sizes = [4, 256], strides = [1, 1]} : vector<4x384xf32> to vector<4x256xf32>
    %115 = vector.extract_strided_slice %113 {offsets = [0, 0], sizes = [4, 256], strides = [1, 1]} : vector<4x384xf32> to vector<4x256xf32>
    %116 = arith.addf %114, %115 : vector<4x256xf32>
    %117 = arith.negf %116 : vector<4x256xf32>
    %118 = math.exp %117 : vector<4x256xf32>
    %cst_31 = arith.constant 1.000000e+00 : f32
    %119 = vector.broadcast %cst_31 : f32 to vector<4x256xf32>
    %120 = arith.addf %119, %118 : vector<4x256xf32>
    %121 = arith.divf %119, %120 : vector<4x256xf32>
    %122 = vector.extract_strided_slice %121 {offsets = [0, 0], sizes = [4, 128], strides = [1, 1]} : vector<4x256xf32> to vector<4x128xf32>
    %123 = vector.extract_strided_slice %121 {offsets = [0, 128], sizes = [4, 128], strides = [1, 1]} : vector<4x256xf32> to vector<4x128xf32>
    %124 = vector.extract_strided_slice %110 {offsets = [0, 256], sizes = [4, 128], strides = [1, 1]} : vector<4x384xf32> to vector<4x128xf32>
    %125 = vector.extract_strided_slice %113 {offsets = [0, 256], sizes = [4, 128], strides = [1, 1]} : vector<4x384xf32> to vector<4x128xf32>
    %126 = arith.mulf %123, %125 : vector<4x128xf32>
    %127 = arith.addf %124, %126 : vector<4x128xf32>
    %128 = math.tanh %127 : vector<4x128xf32>
    %cst_32 = arith.constant 1.000000e+00 : f32
    %129 = vector.broadcast %cst_32 : f32 to vector<4x128xf32>
    %130 = arith.subf %129, %122 : vector<4x128xf32>
    %131 = arith.mulf %130, %128 : vector<4x128xf32>
    %132 = arith.mulf %122, %102 : vector<4x128xf32>
    %133 = arith.addf %131, %132 : vector<4x128xf32>
    %134 = arith.select %111, %133, %102 : vector<4x128xi1>, vector<4x128xf32>
    %cst_33 = arith.constant 0.000000e+00 : f32
    %135 = vector.broadcast %cst_33 : f32 to vector<4x128xf32>
    %136 = arith.select %111, %134, %135 : vector<4x128xi1>, vector<4x128xf32>
    %cst_34 = arith.constant 0.000000e+00 : f32
    %137 = vector.broadcast %cst_34 : f32 to vector<4x128xf32>
    %138 = arith.cmpf oeq, %136, %137 : vector<4x128xf32>
    %cst_35 = arith.constant 0xFF800000 : f32
    %139 = vector.broadcast %cst_35 : f32 to vector<4x128xf32>
    %140 = arith.select %138, %139, %136 : vector<4x128xi1>, vector<4x128xf32>
    %141 = arith.maximumf %109, %140 : vector<4x128xf32>
    %142 = vector.extract_strided_slice %5 {offsets = [16, 0], sizes = [4, 384], strides = [1, 1]} : vector<32x384xf32> to vector<4x384xf32>
    %143 = vector.extract_strided_slice %10 {offsets = [16, 0], sizes = [4, 128], strides = [1, 1]} : vector<32x128xi1> to vector<4x128xi1>
    %144 = arith.truncf %134 : vector<4x128xf32> to vector<4x128xbf16>
    %cst_36 = arith.constant dense<0.000000e+00> : vector<4x384xf32>
    %145 = tpu.matmul %144, %11, %cst_36 {dimension_numbers = #tpu.dot_dimension_numbers<[1], [0], [0], [1], [0, 0, 1, 1], [], []>} : vector<4x128xbf16>, vector<128x384xbf16>, vector<4x384xf32> -> vector<4x384xf32>
    %146 = vector.extract_strided_slice %142 {offsets = [0, 0], sizes = [4, 256], strides = [1, 1]} : vector<4x384xf32> to vector<4x256xf32>
    %147 = vector.extract_strided_slice %145 {offsets = [0, 0], sizes = [4, 256], strides = [1, 1]} : vector<4x384xf32> to vector<4x256xf32>
    %148 = arith.addf %146, %147 : vector<4x256xf32>
    %149 = arith.negf %148 : vector<4x256xf32>
    %150 = math.exp %149 : vector<4x256xf32>
    %cst_37 = arith.constant 1.000000e+00 : f32
    %151 = vector.broadcast %cst_37 : f32 to vector<4x256xf32>
    %152 = arith.addf %151, %150 : vector<4x256xf32>
    %153 = arith.divf %151, %152 : vector<4x256xf32>
    %154 = vector.extract_strided_slice %153 {offsets = [0, 0], sizes = [4, 128], strides = [1, 1]} : vector<4x256xf32> to vector<4x128xf32>
    %155 = vector.extract_strided_slice %153 {offsets = [0, 128], sizes = [4, 128], strides = [1, 1]} : vector<4x256xf32> to vector<4x128xf32>
    %156 = vector.extract_strided_slice %142 {offsets = [0, 256], sizes = [4, 128], strides = [1, 1]} : vector<4x384xf32> to vector<4x128xf32>
    %157 = vector.extract_strided_slice %145 {offsets = [0, 256], sizes = [4, 128], strides = [1, 1]} : vector<4x384xf32> to vector<4x128xf32>
    %158 = arith.mulf %155, %157 : vector<4x128xf32>
    %159 = arith.addf %156, %158 : vector<4x128xf32>
    %160 = math.tanh %159 : vector<4x128xf32>
    %cst_38 = arith.constant 1.000000e+00 : f32
    %161 = vector.broadcast %cst_38 : f32 to vector<4x128xf32>
    %162 = arith.subf %161, %154 : vector<4x128xf32>
    %163 = arith.mulf %162, %160 : vector<4x128xf32>
    %164 = arith.mulf %154, %134 : vector<4x128xf32>
    %165 = arith.addf %163, %164 : vector<4x128xf32>
    %166 = arith.select %143, %165, %134 : vector<4x128xi1>, vector<4x128xf32>
    %cst_39 = arith.constant 0.000000e+00 : f32
    %167 = vector.broadcast %cst_39 : f32 to vector<4x128xf32>
    %168 = arith.select %143, %166, %167 : vector<4x128xi1>, vector<4x128xf32>
    %cst_40 = arith.constant 0.000000e+00 : f32
    %169 = vector.broadcast %cst_40 : f32 to vector<4x128xf32>
    %170 = arith.cmpf oeq, %168, %169 : vector<4x128xf32>
    %cst_41 = arith.constant 0xFF800000 : f32
    %171 = vector.broadcast %cst_41 : f32 to vector<4x128xf32>
    %172 = arith.select %170, %171, %168 : vector<4x128xi1>, vector<4x128xf32>
    %173 = arith.maximumf %141, %172 : vector<4x128xf32>
    %174 = vector.extract_strided_slice %5 {offsets = [20, 0], sizes = [4, 384], strides = [1, 1]} : vector<32x384xf32> to vector<4x384xf32>
    %175 = vector.extract_strided_slice %10 {offsets = [20, 0], sizes = [4, 128], strides = [1, 1]} : vector<32x128xi1> to vector<4x128xi1>
    %176 = arith.truncf %166 : vector<4x128xf32> to vector<4x128xbf16>
    %cst_42 = arith.constant dense<0.000000e+00> : vector<4x384xf32>
    %177 = tpu.matmul %176, %11, %cst_42 {dimension_numbers = #tpu.dot_dimension_numbers<[1], [0], [0], [1], [0, 0, 1, 1], [], []>} : vector<4x128xbf16>, vector<128x384xbf16>, vector<4x384xf32> -> vector<4x384xf32>
    %178 = vector.extract_strided_slice %174 {offsets = [0, 0], sizes = [4, 256], strides = [1, 1]} : vector<4x384xf32> to vector<4x256xf32>
    %179 = vector.extract_strided_slice %177 {offsets = [0, 0], sizes = [4, 256], strides = [1, 1]} : vector<4x384xf32> to vector<4x256xf32>
    %180 = arith.addf %178, %179 : vector<4x256xf32>
    %181 = arith.negf %180 : vector<4x256xf32>
    %182 = math.exp %181 : vector<4x256xf32>
    %cst_43 = arith.constant 1.000000e+00 : f32
    %183 = vector.broadcast %cst_43 : f32 to vector<4x256xf32>
    %184 = arith.addf %183, %182 : vector<4x256xf32>
    %185 = arith.divf %183, %184 : vector<4x256xf32>
    %186 = vector.extract_strided_slice %185 {offsets = [0, 0], sizes = [4, 128], strides = [1, 1]} : vector<4x256xf32> to vector<4x128xf32>
    %187 = vector.extract_strided_slice %185 {offsets = [0, 128], sizes = [4, 128], strides = [1, 1]} : vector<4x256xf32> to vector<4x128xf32>
    %188 = vector.extract_strided_slice %174 {offsets = [0, 256], sizes = [4, 128], strides = [1, 1]} : vector<4x384xf32> to vector<4x128xf32>
    %189 = vector.extract_strided_slice %177 {offsets = [0, 256], sizes = [4, 128], strides = [1, 1]} : vector<4x384xf32> to vector<4x128xf32>
    %190 = arith.mulf %187, %189 : vector<4x128xf32>
    %191 = arith.addf %188, %190 : vector<4x128xf32>
    %192 = math.tanh %191 : vector<4x128xf32>
    %cst_44 = arith.constant 1.000000e+00 : f32
    %193 = vector.broadcast %cst_44 : f32 to vector<4x128xf32>
    %194 = arith.subf %193, %186 : vector<4x128xf32>
    %195 = arith.mulf %194, %192 : vector<4x128xf32>
    %196 = arith.mulf %186, %166 : vector<4x128xf32>
    %197 = arith.addf %195, %196 : vector<4x128xf32>
    %198 = arith.select %175, %197, %166 : vector<4x128xi1>, vector<4x128xf32>
    %cst_45 = arith.constant 0.000000e+00 : f32
    %199 = vector.broadcast %cst_45 : f32 to vector<4x128xf32>
    %200 = arith.select %175, %198, %199 : vector<4x128xi1>, vector<4x128xf32>
    %cst_46 = arith.constant 0.000000e+00 : f32
    %201 = vector.broadcast %cst_46 : f32 to vector<4x128xf32>
    %202 = arith.cmpf oeq, %200, %201 : vector<4x128xf32>
    %cst_47 = arith.constant 0xFF800000 : f32
    %203 = vector.broadcast %cst_47 : f32 to vector<4x128xf32>
    %204 = arith.select %202, %203, %200 : vector<4x128xi1>, vector<4x128xf32>
    %205 = arith.maximumf %173, %204 : vector<4x128xf32>
    %206 = vector.extract_strided_slice %5 {offsets = [24, 0], sizes = [4, 384], strides = [1, 1]} : vector<32x384xf32> to vector<4x384xf32>
    %207 = vector.extract_strided_slice %10 {offsets = [24, 0], sizes = [4, 128], strides = [1, 1]} : vector<32x128xi1> to vector<4x128xi1>
    %208 = arith.truncf %198 : vector<4x128xf32> to vector<4x128xbf16>
    %cst_48 = arith.constant dense<0.000000e+00> : vector<4x384xf32>
    %209 = tpu.matmul %208, %11, %cst_48 {dimension_numbers = #tpu.dot_dimension_numbers<[1], [0], [0], [1], [0, 0, 1, 1], [], []>} : vector<4x128xbf16>, vector<128x384xbf16>, vector<4x384xf32> -> vector<4x384xf32>
    %210 = vector.extract_strided_slice %206 {offsets = [0, 0], sizes = [4, 256], strides = [1, 1]} : vector<4x384xf32> to vector<4x256xf32>
    %211 = vector.extract_strided_slice %209 {offsets = [0, 0], sizes = [4, 256], strides = [1, 1]} : vector<4x384xf32> to vector<4x256xf32>
    %212 = arith.addf %210, %211 : vector<4x256xf32>
    %213 = arith.negf %212 : vector<4x256xf32>
    %214 = math.exp %213 : vector<4x256xf32>
    %cst_49 = arith.constant 1.000000e+00 : f32
    %215 = vector.broadcast %cst_49 : f32 to vector<4x256xf32>
    %216 = arith.addf %215, %214 : vector<4x256xf32>
    %217 = arith.divf %215, %216 : vector<4x256xf32>
    %218 = vector.extract_strided_slice %217 {offsets = [0, 0], sizes = [4, 128], strides = [1, 1]} : vector<4x256xf32> to vector<4x128xf32>
    %219 = vector.extract_strided_slice %217 {offsets = [0, 128], sizes = [4, 128], strides = [1, 1]} : vector<4x256xf32> to vector<4x128xf32>
    %220 = vector.extract_strided_slice %206 {offsets = [0, 256], sizes = [4, 128], strides = [1, 1]} : vector<4x384xf32> to vector<4x128xf32>
    %221 = vector.extract_strided_slice %209 {offsets = [0, 256], sizes = [4, 128], strides = [1, 1]} : vector<4x384xf32> to vector<4x128xf32>
    %222 = arith.mulf %219, %221 : vector<4x128xf32>
    %223 = arith.addf %220, %222 : vector<4x128xf32>
    %224 = math.tanh %223 : vector<4x128xf32>
    %cst_50 = arith.constant 1.000000e+00 : f32
    %225 = vector.broadcast %cst_50 : f32 to vector<4x128xf32>
    %226 = arith.subf %225, %218 : vector<4x128xf32>
    %227 = arith.mulf %226, %224 : vector<4x128xf32>
    %228 = arith.mulf %218, %198 : vector<4x128xf32>
    %229 = arith.addf %227, %228 : vector<4x128xf32>
    %230 = arith.select %207, %229, %198 : vector<4x128xi1>, vector<4x128xf32>
    %cst_51 = arith.constant 0.000000e+00 : f32
    %231 = vector.broadcast %cst_51 : f32 to vector<4x128xf32>
    %232 = arith.select %207, %230, %231 : vector<4x128xi1>, vector<4x128xf32>
    %cst_52 = arith.constant 0.000000e+00 : f32
    %233 = vector.broadcast %cst_52 : f32 to vector<4x128xf32>
    %234 = arith.cmpf oeq, %232, %233 : vector<4x128xf32>
    %cst_53 = arith.constant 0xFF800000 : f32
    %235 = vector.broadcast %cst_53 : f32 to vector<4x128xf32>
    %236 = arith.select %234, %235, %232 : vector<4x128xi1>, vector<4x128xf32>
    %237 = arith.maximumf %205, %236 : vector<4x128xf32>
    %238 = vector.extract_strided_slice %5 {offsets = [28, 0], sizes = [4, 384], strides = [1, 1]} : vector<32x384xf32> to vector<4x384xf32>
    %239 = vector.extract_strided_slice %10 {offsets = [28, 0], sizes = [4, 128], strides = [1, 1]} : vector<32x128xi1> to vector<4x128xi1>
    %240 = arith.truncf %230 : vector<4x128xf32> to vector<4x128xbf16>
    %cst_54 = arith.constant dense<0.000000e+00> : vector<4x384xf32>
    %241 = tpu.matmul %240, %11, %cst_54 {dimension_numbers = #tpu.dot_dimension_numbers<[1], [0], [0], [1], [0, 0, 1, 1], [], []>} : vector<4x128xbf16>, vector<128x384xbf16>, vector<4x384xf32> -> vector<4x384xf32>
    %242 = vector.extract_strided_slice %238 {offsets = [0, 0], sizes = [4, 256], strides = [1, 1]} : vector<4x384xf32> to vector<4x256xf32>
    %243 = vector.extract_strided_slice %241 {offsets = [0, 0], sizes = [4, 256], strides = [1, 1]} : vector<4x384xf32> to vector<4x256xf32>
    %244 = arith.addf %242, %243 : vector<4x256xf32>
    %245 = arith.negf %244 : vector<4x256xf32>
    %246 = math.exp %245 : vector<4x256xf32>
    %cst_55 = arith.constant 1.000000e+00 : f32
    %247 = vector.broadcast %cst_55 : f32 to vector<4x256xf32>
    %248 = arith.addf %247, %246 : vector<4x256xf32>
    %249 = arith.divf %247, %248 : vector<4x256xf32>
    %250 = vector.extract_strided_slice %249 {offsets = [0, 0], sizes = [4, 128], strides = [1, 1]} : vector<4x256xf32> to vector<4x128xf32>
    %251 = vector.extract_strided_slice %249 {offsets = [0, 128], sizes = [4, 128], strides = [1, 1]} : vector<4x256xf32> to vector<4x128xf32>
    %252 = vector.extract_strided_slice %238 {offsets = [0, 256], sizes = [4, 128], strides = [1, 1]} : vector<4x384xf32> to vector<4x128xf32>
    %253 = vector.extract_strided_slice %241 {offsets = [0, 256], sizes = [4, 128], strides = [1, 1]} : vector<4x384xf32> to vector<4x128xf32>
    %254 = arith.mulf %251, %253 : vector<4x128xf32>
    %255 = arith.addf %252, %254 : vector<4x128xf32>
    %256 = math.tanh %255 : vector<4x128xf32>
    %cst_56 = arith.constant 1.000000e+00 : f32
    %257 = vector.broadcast %cst_56 : f32 to vector<4x128xf32>
    %258 = arith.subf %257, %250 : vector<4x128xf32>
    %259 = arith.mulf %258, %256 : vector<4x128xf32>
    %260 = arith.mulf %250, %230 : vector<4x128xf32>
    %261 = arith.addf %259, %260 : vector<4x128xf32>
    %262 = arith.select %239, %261, %230 : vector<4x128xi1>, vector<4x128xf32>
    %cst_57 = arith.constant 0.000000e+00 : f32
    %263 = vector.broadcast %cst_57 : f32 to vector<4x128xf32>
    %264 = arith.select %239, %262, %263 : vector<4x128xi1>, vector<4x128xf32>
    %cst_58 = arith.constant 0.000000e+00 : f32
    %265 = vector.broadcast %cst_58 : f32 to vector<4x128xf32>
    %266 = arith.cmpf oeq, %264, %265 : vector<4x128xf32>
    %cst_59 = arith.constant 0xFF800000 : f32
    %267 = vector.broadcast %cst_59 : f32 to vector<4x128xf32>
    %268 = arith.select %266, %267, %264 : vector<4x128xi1>, vector<4x128xf32>
    %269 = arith.maximumf %237, %268 : vector<4x128xf32>
    %270 = tpu.iota {dimensions = array<i32: 1>} : vector<4x128xi32>
    %c32_i32 = arith.constant 32 : i32
    %271 = vector.broadcast %c32_i32 : i32 to vector<4x128xi32>
    %272 = arith.cmpi slt, %270, %271 : vector<4x128xi32>
    %cst_60 = arith.constant 0.000000e+00 : f32
    %273 = vector.broadcast %cst_60 : f32 to vector<4x128xf32>
    %274 = arith.select %272, %269, %273 : vector<4x128xi1>, vector<4x128xf32>
    %275 = vector.extract_strided_slice %274 {offsets = [0, 0], sizes = [2, 128], strides = [1, 1]} : vector<4x128xf32> to vector<2x128xf32>
    %276 = vector.extract_strided_slice %274 {offsets = [2, 0], sizes = [2, 128], strides = [1, 1]} : vector<4x128xf32> to vector<2x128xf32>
    %277 = arith.subf %275, %276 : vector<2x128xf32>
    %278 = math.absf %277 : vector<2x128xf32>
    %279 = arith.mulf %275, %276 : vector<2x128xf32>
    %280 = tpu.concatenate %275, %276, %278, %279 in 1 : vector<2x128xf32>, vector<2x128xf32>, vector<2x128xf32>, vector<2x128xf32> -> vector<2x512xf32>
    %281 = arith.truncf %280 : vector<2x512xf32> to vector<2x512xbf16>
    %c0_61 = arith.constant 0 : index
    %c0_62 = arith.constant 0 : index
    %282 = vector.load %arg5[%c0_61, %c0_62] : memref<512x128xbf16, #tpu.memory_space<vmem>>, vector<512x128xbf16>
    %cst_63 = arith.constant dense<0.000000e+00> : vector<2x128xf32>
    %283 = tpu.matmul %281, %282, %cst_63 {dimension_numbers = #tpu.dot_dimension_numbers<[1], [0], [0], [1], [0, 0, 1, 1], [], []>} : vector<2x512xbf16>, vector<512x128xbf16>, vector<2x128xf32> -> vector<2x128xf32>
    %c0_64 = arith.constant 0 : index
    %c0_65 = arith.constant 0 : index
    %284 = vector.load %arg6[%c0_64, %c0_65] : memref<1x128xf32, #tpu.memory_space<vmem>>, vector<1x128xf32>
    %285 = vector.broadcast %284 : vector<1x128xf32> to vector<2x128xf32>
    %286 = arith.addf %283, %285 : vector<2x128xf32>
    %cst_66 = arith.constant 0.000000e+00 : f32
    %287 = vector.broadcast %cst_66 : f32 to vector<2x128xf32>
    %288 = arith.maximumf %286, %287 : vector<2x128xf32>
    %289 = arith.truncf %288 : vector<2x128xf32> to vector<2x128xbf16>
    %c0_67 = arith.constant 0 : index
    %c0_68 = arith.constant 0 : index
    %290 = vector.load %arg7[%c0_67, %c0_68] : memref<128x128xbf16, #tpu.memory_space<vmem>>, vector<128x128xbf16>
    %cst_69 = arith.constant dense<0.000000e+00> : vector<2x128xf32>
    %291 = tpu.matmul %289, %290, %cst_69 {dimension_numbers = #tpu.dot_dimension_numbers<[1], [0], [0], [1], [0, 0, 1, 1], [], []>} : vector<2x128xbf16>, vector<128x128xbf16>, vector<2x128xf32> -> vector<2x128xf32>
    %c0_70 = arith.constant 0 : index
    %c0_71 = arith.constant 0 : index
    %292 = vector.load %arg8[%c0_70, %c0_71] : memref<1x128xf32, #tpu.memory_space<vmem>>, vector<1x128xf32>
    %293 = vector.broadcast %292 : vector<1x128xf32> to vector<2x128xf32>
    %294 = arith.addf %291, %293 : vector<2x128xf32>
    %c0_72 = arith.constant 0 : index
    %c0_73 = arith.constant 0 : index
    %295 = vector.load %arg9[%c0_72, %c0_73] : memref<2x128xf32, #tpu.memory_space<vmem>>, vector<2x128xf32>
    tpu.vector_store %arg9[%c0_72, %c0_73], %294 {strides = array<i32>} : memref<2x128xf32, #tpu.memory_space<vmem>>, vector<2x128xf32>,
    return
  }
}

</mosaic_0001>

<llo_original>
// kernel: forward.1
$region0: #{forward.1}
  #allocation0 [shape = 'u32[]', space=smem, size = 0x4, offset = 0x4, fixed_abs, tag = 'smem constant byte address 0x4 - core index']
  #allocation1 [shape = 'u32[144,128]{1,0:T(1,128)}', space=vmem, size = 0x12000, scoped, tag = 'internal scratch']
  %s0 = inlined_call_operand.vmem [shape: bf16[32,16], index: 0, kind: input, shape index: {}]
  %s1 = inlined_call_operand.vmem [shape: f32[32,1], index: 1, kind: input, shape index: {}]
  %s2 = inlined_call_operand.vmem [shape: bf16[16,384], index: 2, kind: input, shape index: {}]
  %s3 = inlined_call_operand.hbm [shape: bf16[128,384], index: 3, kind: input, shape index: {}]
  %s4 = inlined_call_operand.vmem [shape: f32[1,384], index: 4, kind: input, shape index: {}]
  %s5 = inlined_call_operand.vmem [shape: bf16[512,128], index: 5, kind: input, shape index: {}]
  %s6 = inlined_call_operand.hbm [shape: f32[1,128], index: 6, kind: input, shape index: {}]
  %s7 = inlined_call_operand.vmem [shape: bf16[128,128], index: 7, kind: input, shape index: {}]
  %s8 = inlined_call_operand.hbm [shape: f32[1,128], index: 8, kind: input, shape index: {}]
  %s9 = inlined_call_operand.hbm [shape: f32[2,128], index: 9, kind: output, shape index: {}]
  %s10 = sld [smem:[#allocation0]]
  $region58: #{forward.1} parent=0
    _
  %s12 = ssub.s32 1, %s10
  %s13 = scalar_select 0, %s12, %s10
  $region1: #{forward.1} parent=0
    #allocation2 [shape = 'u8[98304]{0}', space=vmem, size = 0x18000, scoped, tag = 'input window, operand 3, single buffered']
    #allocation3 [shape = 's32[1]{0}', space=sflag, size = 0x4, scoped, tag = 'scoped memory for forward.1']
    #allocation4 [shape = 's32[1]{0}', space=sflag, size = 0x4, scoped, tag = 'scoped memory for forward.1']
    #allocation5 [shape = 'u8[512]{0}', space=vmem, size = 0x400, scoped, tag = 'input window, operand 6, single buffered']
    #allocation6 [shape = 's32[1]{0}', space=sflag, size = 0x4, scoped, tag = 'scoped memory for forward.1']
    #allocation7 [shape = 'u8[512]{0}', space=vmem, size = 0x400, scoped, tag = 'input window, operand 8, single buffered']
    #allocation8 [shape = 'u8[1024]{0}', space=vmem, size = 0x400, scoped, tag = 'output window, operand 0, single buffered']
    %14 = vsyncpa [#allocation3], 0
    %15 = vsyncpa [#allocation6], 0
    %16 = vsyncpa [#allocation4], 0
    // Predicated region
    $region2: #{forward.1} parent=1 // pred_check
      _
    $region3: #{forward.1} parent=1 // pred_check_branch
      %18 = sbr.rel (0) target = $region5
    $region4: #{forward.1} parent=1 // pred_region
      _
    $region5: #{forward.1} parent=1 // pred_fallthru
      _
    // Predicated region
    $region6: #{forward.1} parent=1 // pred_check
      _
    $region7: #{forward.1} parent=1 // pred_check_branch
      %20 = sbr.rel (0) target = $region9
    $region8: #{forward.1} parent=1 // pred_region
      _
    $region9: #{forward.1} parent=1 // pred_fallthru
      _
    // Predicated region
    $region10: #{forward.1} parent=1 // pred_check
      _
    $region11: #{forward.1} parent=1 // pred_check_branch
      %22 = sbr.rel (0) target = $region13
    $region12: #{forward.1} parent=1 // pred_region
      _
    $region13: #{forward.1} parent=1 // pred_fallthru
      _
    // Predicated region
    $region14: #{forward.1} parent=1 // pred_check
      _
    $region15: #{forward.1} parent=1 // pred_check_branch
      %24 = sbr.rel (0) target = $region17
    $region16: #{forward.1} parent=1 // pred_region
      %s26 = ssub.s32 3072, 3072
      %27 = vsyncadd [#allocation3], %s26
      %s28 = sshll.u32 [#allocation2], 4
      %s29 = int_to_ptr.vmem [resolvable:$true] %s28
      %34 = dma.hbm_to_vmem [thread:$0]  %s3, 3072, %s29, [#allocation3], 192, 192, 12
    $region17: #{forward.1} parent=1 // pred_fallthru
      _
    // Predicated region
    $region18: #{forward.1} parent=1 // pred_check
      _
    $region19: #{forward.1} parent=1 // pred_check_branch
      %36 = sbr.rel (0) target = $region21
    $region20: #{forward.1} parent=1 // pred_region
      _
    $region21: #{forward.1} parent=1 // pred_fallthru
      _
    // Predicated region
    $region22: #{forward.1} parent=1 // pred_check
      _
    $region23: #{forward.1} parent=1 // pred_check_branch
      %38 = sbr.rel (0) target = $region25
    $region24: #{forward.1} parent=1 // pred_region
      _
    $region25: #{forward.1} parent=1 // pred_fallthru
      _
    // Predicated region
    $region26: #{forward.1} parent=1 // pred_check
      _
    $region27: #{forward.1} parent=1 // pred_check_branch
      %40 = sbr.rel (0) target = $region29
    $region28: #{forward.1} parent=1 // pred_region
      %s42 = ssub.s32 16, 16
      %43 = vsyncadd [#allocation6], %s42
      %s45 = sshll.u32 [#allocation5], 4
      %s46 = int_to_ptr.vmem [resolvable:$true] %s45
      %48 = dma.hbm_to_vmem [thread:$0]  %s6, 16, %s46, [#allocation6]
    $region29: #{forward.1} parent=1 // pred_fallthru
      _
    // Predicated region
    $region30: #{forward.1} parent=1 // pred_check
      _
    $region31: #{forward.1} parent=1 // pred_check_branch
      %50 = sbr.rel (0) target = $region33
    $region32: #{forward.1} parent=1 // pred_region
      _
    $region33: #{forward.1} parent=1 // pred_fallthru
      _
    // Predicated region
    $region34: #{forward.1} parent=1 // pred_check
      _
    $region35: #{forward.1} parent=1 // pred_check_branch
      %52 = sbr.rel (0) target = $region37
    $region36: #{forward.1} parent=1 // pred_region
      %s54 = ssub.s32 16, 16
      %55 = vsyncadd [#allocation6], %s54
      %s57 = sshll.u32 [#allocation7], 4
      %s58 = int_to_ptr.vmem [resolvable:$true] %s57
      %60 = dma.hbm_to_vmem [thread:$0]  %s8, 16, %s58, [#allocation6]
    $region37: #{forward.1} parent=1 // pred_fallthru
      _
    // Predicated region
    $region38: #{forward.1} parent=1 // pred_check
      _
    $region39: #{forward.1} parent=1 // pred_check_branch
      %62 = sbr.rel (0) target = $region41
    $region40: #{forward.1} parent=1 // pred_region
      %63 = dma.done [#allocation3], 3072
    $region41: #{forward.1} parent=1 // pred_fallthru
      _
    // Predicated region
    $region42: #{forward.1} parent=1 // pred_check
      _
    $region43: #{forward.1} parent=1 // pred_check_branch
      %65 = sbr.rel (0) target = $region45
    $region44: #{forward.1} parent=1 // pred_region
      %66 = dma.done [#allocation6], 16
    $region45: #{forward.1} parent=1 // pred_fallthru
      _
    // Predicated region
    $region46: #{forward.1} parent=1 // pred_check
      _
    $region47: #{forward.1} parent=1 // pred_check_branch
      %68 = sbr.rel (0) target = $region49
    $region48: #{forward.1} parent=1 // pred_region
      %69 = dma.done [#allocation6], 16
    $region49: #{forward.1} parent=1 // pred_fallthru
      _
    %v71 = vld [vmem:[%s0] sm:$0xf]
    %v72 = vld [vmem:[%s0 + $0x4] sm:$0xf]
    %v73 = vld [vmem:[%s0 + $0x8] sm:$0xf]
    %v74 = vld [vmem:[%s0 + $0xc] sm:$0xf]
    %v75 = vld [vmem:[%s2] sm:$0xff]
    %v76 = vld [vmem:[%s2 + $0x8] sm:$0xf]
    %v77 = vld [vmem:[%s2 + $0xc] sm:$0xff]
    %v78 = vld [vmem:[%s2 + $0x14] sm:$0xf]
    %v79 = vld [vmem:[%s4] sm:$0x7]
    %v81 = vlaneseq
    %v82 = vshrl.u32 %v81, 7
    %v83 = vsub.s32 0, %v82
    %v84 = vrot.slane %v79, %v83
    %v85 = vlaneseq
    %v86 = vshrl.u32 %v85, 7
    %v87 = vsub.s32 1, %v86
    %v88 = vrot.slane %v79, %v87
    %v89 = vlaneseq
    %v90 = vshrl.u32 %v89, 7
    %v91 = vsub.s32 2, %v90
    %v92 = vrot.slane %v79, %v91
    %v100 = vunpack.c.l.b16 %v71
    %v101 = vunpack.c.l.b16 %v72
    %v102 = vunpack.c.l.b16 %v73
    %v103 = vunpack.c.l.b16 %v74
    %v104 = vpack.c.b16 %v101, %v100
    %v105 = vpack.c.b16 %v103, %v102
    %v110 = vunpack.c.l.b16 %v75
    %v111 = vunpack.c.h.b16 %v75
    %v112 = vunpack.c.l.b16 %v76
    %v113 = vunpack.c.l.b16 %v77
    %v114 = vunpack.c.h.b16 %v77
    %v115 = vunpack.c.l.b16 %v78
    %v116 = vpack.c.b16 %v113, %v110
    %v117 = vpack.c.b16 %v114, %v111
    %v118 = vpack.c.b16 %v115, %v112
    %vm122 = vcmask 130048
    %v124 = vsel %vm122, %v104, 0
    %v127 = vsel %vm122, %v105, 0
    %129 = vmatprep.subr.bf16.mxu0 %v117
    %130 = vmatpush1.bf16.msra.mxu0 %v116
    %131 = vmatprep.subr.bf16.mxu0 0
    %132 = vmatpush1.bf16.msra.mxu0 0
    %133 = vmatprep.subr.bf16.mxu0 0
    %134 = vmatpush1.bf16.msra.mxu0 0
    %135 = vmatprep.subr.bf16.mxu0 0
    %136 = vmatpush1.bf16.msra.mxu0 0
    %137 = vmatprep.subr.bf16.mxu0 0
    %138 = vmatpush1.bf16.msra.mxu0 0
    %139 = vmatprep.subr.bf16.mxu0 0
    %140 = vmatpush1.bf16.msra.mxu0 0
    %141 = vmatprep.subr.bf16.mxu0 0
    %142 = vmatpush1.bf16.msra.mxu0 0
    %143 = vmatprep.subr.bf16.mxu0 0
    %144 = vmatpush1.bf16.msra.mxu0 0
    %145 = vmatprep.subr.bf16.mxu0 0
    %146 = vmatpush1.bf16.msra.mxu0 0
    %147 = vmatprep.subr.bf16.mxu0 0
    %148 = vmatpush1.bf16.msra.mxu0 0
    %149 = vmatprep.subr.bf16.mxu0 0
    %150 = vmatpush1.bf16.msra.mxu0 0
    %151 = vmatprep.subr.bf16.mxu0 0
    %152 = vmatpush1.bf16.msra.mxu0 0
    %153 = vmatprep.subr.bf16.mxu0 0
    %154 = vmatpush1.bf16.msra.mxu0 0
    %155 = vmatprep.subr.bf16.mxu0 0
    %156 = vmatpush1.bf16.msra.mxu0 0
    %157 = vmatprep.subr.bf16.mxu0 0
    %158 = vmatpush1.bf16.msra.mxu0 0
    %159 = vmatprep.subr.bf16.mxu0 0
    %160 = vmatpush1.bf16.msra.mxu0 0
    %161 = vmatprep.mubr.bf16.mxu0 0
    %162 = vmatmul.mubr.bf16.gmra.mrb[0].mxu0 %v124
    %v163 = vpop.f32.mrb[0].mxu0
    %v164 = vadd.f32 %v84, %v163
    %v165 = vpop.f32.mrb[0].mxu0
    %v166 = vadd.f32 %v88, %v165
    %v167 = vpop.f32.mrb[0].mxu0
    %v168 = vadd.f32 %v84, %v167
    %v169 = vpop.f32.mrb[0].mxu0
    %v170 = vadd.f32 %v88, %v169
    %171 = vmatprep.mubr.bf16.mxu0 0
    %172 = vmatmul.mubr.bf16.gmra.mrb[0].mxu0 %v127
    %v173 = vpop.f32.mrb[0].mxu0
    %v174 = vadd.f32 %v84, %v173
    %v175 = vpop.f32.mrb[0].mxu0
    %v176 = vadd.f32 %v88, %v175
    %v177 = vpop.f32.mrb[0].mxu0
    %v178 = vadd.f32 %v84, %v177
    %v179 = vpop.f32.mrb[0].mxu0
    %v180 = vadd.f32 %v88, %v179
    %181 = vdwg.mxu0
    %182 = vmatprep.subr.bf16.mxu0 0
    %183 = vmatpush1.bf16.msra.mxu0 %v118
    %184 = vmatprep.subr.bf16.mxu0 0
    %185 = vmatpush1.bf16.msra.mxu0 0
    %186 = vmatprep.subr.bf16.mxu0 0
    %187 = vmatpush1.bf16.msra.mxu0 0
    %188 = vmatprep.subr.bf16.mxu0 0
    %189 = vmatpush1.bf16.msra.mxu0 0
    %190 = vmatprep.subr.bf16.mxu0 0
    %191 = vmatpush1.bf16.msra.mxu0 0
    %192 = vmatprep.subr.bf16.mxu0 0
    %193 = vmatpush1.bf16.msra.mxu0 0
    %194 = vmatprep.subr.bf16.mxu0 0
    %195 = vmatpush1.bf16.msra.mxu0 0
    %196 = vmatprep.subr.bf16.mxu0 0
    %197 = vmatpush1.bf16.msra.mxu0 0
    %198 = vmatprep.subr.bf16.mxu0 0
    %199 = vmatpush1.bf16.msra.mxu0 0
    %200 = vmatprep.subr.bf16.mxu0 0
    %201 = vmatpush1.bf16.msra.mxu0 0
    %202 = vmatprep.subr.bf16.mxu0 0
    %203 = vmatpush1.bf16.msra.mxu0 0
    %204 = vmatprep.subr.bf16.mxu0 0
    %205 = vmatpush1.bf16.msra.mxu0 0
    %206 = vmatprep.subr.bf16.mxu0 0
    %207 = vmatpush1.bf16.msra.mxu0 0
    %208 = vmatprep.subr.bf16.mxu0 0
    %209 = vmatpush1.bf16.msra.mxu0 0
    %210 = vmatprep.subr.bf16.mxu0 0
    %211 = vmatpush1.bf16.msra.mxu0 0
    %212 = vmatprep.subr.bf16.mxu0 0
    %213 = vmatpush1.bf16.msra.mxu0 0
    %214 = vmatprep.mubr.bf16.mxu0 0
    %215 = vmatmul.mubr.bf16.gmra.mrb[0].mxu0 %v124
    %v216 = vpop.f32.mrb[0].mxu0
    %v217 = vadd.f32 %v92, %v216
    %v218 = vpop.f32.mrb[0].mxu0
    %v219 = vpop.f32.mrb[0].mxu0
    %v220 = vadd.f32 %v92, %v219
    %v221 = vpop.f32.mrb[0].mxu0
    %222 = vmatprep.mubr.bf16.mxu0 0
    %223 = vmatmul.mubr.bf16.gmra.mrb[0].mxu0 %v127
    %v224 = vpop.f32.mrb[0].mxu0
    %v225 = vadd.f32 %v92, %v224
    %v226 = vpop.f32.mrb[0].mxu0
    %v227 = vpop.f32.mrb[0].mxu0
    %v228 = vadd.f32 %v92, %v227
    %v229 = vpop.f32.mrb[0].mxu0
    %230 = vdwg.mxu0
    %v231 = vld [vmem:[%s1] sm:$0xff]
    %v232 = vld [vmem:[%s1 + $0x8] sm:$0xff]
    %v233 = vld [vmem:[%s1 + $0x10] sm:$0xff]
    %v234 = vld [vmem:[%s1 + $0x18] sm:$0xff]
    %236 = vset.pattern.permute.xlu0 0
    %237 = vperm.xlu0 %236, %v231
    %v238 = vpop.permute.xlu0 %237
    %241 = vset.pattern.permute.xlu0 0
    %242 = vperm.xlu0 %241, %v232
    %v243 = vpop.permute.xlu0 %242
    %246 = vset.pattern.permute.xlu0 0
    %247 = vperm.xlu0 %246, %v233
    %v248 = vpop.permute.xlu0 %247
    %251 = vset.pattern.permute.xlu0 0
    %252 = vperm.xlu0 %251, %v234
    %v253 = vpop.permute.xlu0 %252
    %vm255 = vcmp.gt.f32.partialorder %v238, 0.0
    %vm256 = vcmp.gt.f32.partialorder %v243, 0.0
    %vm257 = vcmp.gt.f32.partialorder %v248, 0.0
    %vm258 = vcmp.gt.f32.partialorder %v253, 0.0
    %v259 = vld [vmem:[#allocation2] sm:$0xff]
    %v260 = vld [vmem:[#allocation2 + $0x8] sm:$0xf]
    %v261 = vld [vmem:[#allocation2 + $0xc] sm:$0xff]
    %v262 = vld [vmem:[#allocation2 + $0x14] sm:$0xf]
    %v263 = vld [vmem:[#allocation2 + $0x18] sm:$0xff]
    %v264 = vld [vmem:[#allocation2 + $0x20] sm:$0xf]
    %v265 = vld [vmem:[#allocation2 + $0x24] sm:$0xff]
    %v266 = vld [vmem:[#allocation2 + $0x2c] sm:$0xf]
    %v267 = vld [vmem:[#allocation2 + $0x30] sm:$0xff]
    %v268 = vld [vmem:[#allocation2 + $0x38] sm:$0xf]
    %v269 = vld [vmem:[#allocation2 + $0x3c] sm:$0xff]
    %v270 = vld [vmem:[#allocation2 + $0x44] sm:$0xf]
    %v271 = vld [vmem:[#allocation2 + $0x48] sm:$0xff]
    %v272 = vld [vmem:[#allocation2 + $0x50] sm:$0xf]
    %v273 = vld [vmem:[#allocation2 + $0x54] sm:$0xff]
    %v274 = vld [vmem:[#allocation2 + $0x5c] sm:$0xf]
    %v275 = vld [vmem:[#allocation2 + $0x60] sm:$0xff]
    %v276 = vld [vmem:[#allocation2 + $0x68] sm:$0xf]
    %v277 = vld [vmem:[#allocation2 + $0x6c] sm:$0xff]
    %v278 = vld [vmem:[#allocation2 + $0x74] sm:$0xf]
    %v279 = vld [vmem:[#allocation2 + $0x78] sm:$0xff]
    %v280 = vld [vmem:[#allocation2 + $0x80] sm:$0xf]
    %v281 = vld [vmem:[#allocation2 + $0x84] sm:$0xff]
    %v282 = vld [vmem:[#allocation2 + $0x8c] sm:$0xf]
    %v283 = vld [vmem:[#allocation2 + $0x90] sm:$0xff]
    %v284 = vld [vmem:[#allocation2 + $0x98] sm:$0xf]
    %v285 = vld [vmem:[#allocation2 + $0x9c] sm:$0xff]
    %v286 = vld [vmem:[#allocation2 + $0xa4] sm:$0xf]
    %v287 = vld [vmem:[#allocation2 + $0xa8] sm:$0xff]
    %v288 = vld [vmem:[#allocation2 + $0xb0] sm:$0xf]
    %v289 = vld [vmem:[#allocation2 + $0xb4] sm:$0xff]
    %v290 = vld [vmem:[#allocation2 + $0xbc] sm:$0xf]
    %v323 = vunpack.c.l.b16 %v259
    %v324 = vunpack.c.h.b16 %v259
    %v325 = vunpack.c.l.b16 %v260
    %v326 = vunpack.c.l.b16 %v261
    %v327 = vunpack.c.h.b16 %v261
    %v328 = vunpack.c.l.b16 %v262
    %v329 = vunpack.c.l.b16 %v263
    %v330 = vunpack.c.h.b16 %v263
    %v331 = vunpack.c.l.b16 %v264
    %v332 = vunpack.c.l.b16 %v265
    %v333 = vunpack.c.h.b16 %v265
    %v334 = vunpack.c.l.b16 %v266
    %v335 = vunpack.c.l.b16 %v267
    %v336 = vunpack.c.h.b16 %v267
    %v337 = vunpack.c.l.b16 %v268
    %v338 = vunpack.c.l.b16 %v269
    %v339 = vunpack.c.h.b16 %v269
    %v340 = vunpack.c.l.b16 %v270
    %v341 = vunpack.c.l.b16 %v271
    %v342 = vunpack.c.h.b16 %v271
    %v343 = vunpack.c.l.b16 %v272
    %v344 = vunpack.c.l.b16 %v273
    %v345 = vunpack.c.h.b16 %v273
    %v346 = vunpack.c.l.b16 %v274
    %v347 = vunpack.c.l.b16 %v275
    %v348 = vunpack.c.h.b16 %v275
    %v349 = vunpack.c.l.b16 %v276
    %v350 = vunpack.c.l.b16 %v277
    %v351 = vunpack.c.h.b16 %v277
    %v352 = vunpack.c.l.b16 %v278
    %v353 = vunpack.c.l.b16 %v279
    %v354 = vunpack.c.h.b16 %v279
    %v355 = vunpack.c.l.b16 %v280
    %v356 = vunpack.c.l.b16 %v281
    %v357 = vunpack.c.h.b16 %v281
    %v358 = vunpack.c.l.b16 %v282
    %v359 = vunpack.c.l.b16 %v283
    %v360 = vunpack.c.h.b16 %v283
    %v361 = vunpack.c.l.b16 %v284
    %v362 = vunpack.c.l.b16 %v285
    %v363 = vunpack.c.h.b16 %v285
    %v364 = vunpack.c.l.b16 %v286
    %v365 = vunpack.c.l.b16 %v287
    %v366 = vunpack.c.h.b16 %v287
    %v367 = vunpack.c.l.b16 %v288
    %v368 = vunpack.c.l.b16 %v289
    %v369 = vunpack.c.h.b16 %v289
    %v370 = vunpack.c.l.b16 %v290
    %v371 = vpack.c.b16 %v326, %v323
    %v372 = vpack.c.b16 %v327, %v324
    %v373 = vpack.c.b16 %v328, %v325
    %v374 = vpack.c.b16 %v332, %v329
    %v375 = vpack.c.b16 %v333, %v330
    %v376 = vpack.c.b16 %v334, %v331
    %v377 = vpack.c.b16 %v338, %v335
    %v378 = vpack.c.b16 %v339, %v336
    %v379 = vpack.c.b16 %v340, %v337
    %v380 = vpack.c.b16 %v344, %v341
    %v381 = vpack.c.b16 %v345, %v342
    %v382 = vpack.c.b16 %v346, %v343
    %v383 = vpack.c.b16 %v350, %v347
    %v384 = vpack.c.b16 %v351, %v348
    %v385 = vpack.c.b16 %v352, %v349
    %v386 = vpack.c.b16 %v356, %v353
    %v387 = vpack.c.b16 %v357, %v354
    %v388 = vpack.c.b16 %v358, %v355
    %v389 = vpack.c.b16 %v362, %v359
    %v390 = vpack.c.b16 %v363, %v360
    %v391 = vpack.c.b16 %v364, %v361
    %v392 = vpack.c.b16 %v368, %v365
    %v393 = vpack.c.b16 %v369, %v366
    %v394 = vpack.c.b16 %v370, %v367
    %419 = vmatprep.subr.bf16.mxu0 %v372
    %420 = vmatpush1.bf16.msra.mxu0 %v371
    %421 = vmatprep.subr.bf16.mxu0 %v375
    %422 = vmatpush1.bf16.msra.mxu0 %v374
    %423 = vmatprep.subr.bf16.mxu0 %v378
    %424 = vmatpush1.bf16.msra.mxu0 %v377
    %425 = vmatprep.subr.bf16.mxu0 %v381
    %426 = vmatpush1.bf16.msra.mxu0 %v380
    %427 = vmatprep.subr.bf16.mxu0 %v384
    %428 = vmatpush1.bf16.msra.mxu0 %v383
    %429 = vmatprep.subr.bf16.mxu0 %v387
    %430 = vmatpush1.bf16.msra.mxu0 %v386
    %431 = vmatprep.subr.bf16.mxu0 %v390
    %432 = vmatpush1.bf16.msra.mxu0 %v389
    %433 = vmatprep.subr.bf16.mxu0 %v393
    %434 = vmatpush1.bf16.msra.mxu0 %v392
    %435 = vmatprep.subr.bf16.mxu0 0
    %436 = vmatpush1.bf16.msra.mxu0 0
    %437 = vmatprep.subr.bf16.mxu0 0
    %438 = vmatpush1.bf16.msra.mxu0 0
    %439 = vmatprep.subr.bf16.mxu0 0
    %440 = vmatpush1.bf16.msra.mxu0 0
    %441 = vmatprep.subr.bf16.mxu0 0
    %442 = vmatpush1.bf16.msra.mxu0 0
    %443 = vmatprep.subr.bf16.mxu0 0
    %444 = vmatpush1.bf16.msra.mxu0 0
    %445 = vmatprep.subr.bf16.mxu0 0
    %446 = vmatpush1.bf16.msra.mxu0 0
    %447 = vmatprep.subr.bf16.mxu0 0
    %448 = vmatpush1.bf16.msra.mxu0 0
    %449 = vmatprep.subr.bf16.mxu0 0
    %450 = vmatpush1.bf16.msra.mxu0 0
    %451 = vmatprep.mubr.bf16.mxu0 0
    %452 = vmatmul.mubr.bf16.gmra.mrb[0].mxu0 0
    %v453 = vpop.f32.mrb[0].mxu0
    %v454 = vadd.f32 0.0, %v453
    %v455 = vpop.f32.mrb[0].mxu0
    %v456 = vadd.f32 0.0, %v455
    %v457 = vpop.f32.mrb[0].mxu0
    %v458 = vpop.f32.mrb[0].mxu0
    %459 = vdwg.mxu0
    %460 = vmatprep.subr.bf16.mxu0 0
    %461 = vmatpush1.bf16.msra.mxu0 %v373
    %462 = vmatprep.subr.bf16.mxu0 0
    %463 = vmatpush1.bf16.msra.mxu0 %v376
    %464 = vmatprep.subr.bf16.mxu0 0
    %465 = vmatpush1.bf16.msra.mxu0 %v379
    %466 = vmatprep.subr.bf16.mxu0 0
    %467 = vmatpush1.bf16.msra.mxu0 %v382
    %468 = vmatprep.subr.bf16.mxu0 0
    %469 = vmatpush1.bf16.msra.mxu0 %v385
    %470 = vmatprep.subr.bf16.mxu0 0
    %471 = vmatpush1.bf16.msra.mxu0 %v388
    %472 = vmatprep.subr.bf16.mxu0 0
    %473 = vmatpush1.bf16.msra.mxu0 %v391
    %474 = vmatprep.subr.bf16.mxu0 0
    %475 = vmatpush1.bf16.msra.mxu0 %v394
    %476 = vmatprep.subr.bf16.mxu0 0
    %477 = vmatpush1.bf16.msra.mxu0 0
    %478 = vmatprep.subr.bf16.mxu0 0
    %479 = vmatpush1.bf16.msra.mxu0 0
    %480 = vmatprep.subr.bf16.mxu0 0
    %481 = vmatpush1.bf16.msra.mxu0 0
    %482 = vmatprep.subr.bf16.mxu0 0
    %483 = vmatpush1.bf16.msra.mxu0 0
    %484 = vmatprep.subr.bf16.mxu0 0
    %485 = vmatpush1.bf16.msra.mxu0 0
    %486 = vmatprep.subr.bf16.mxu0 0
    %487 = vmatpush1.bf16.msra.mxu0 0
    %488 = vmatprep.subr.bf16.mxu0 0
    %489 = vmatpush1.bf16.msra.mxu0 0
    %490 = vmatprep.subr.bf16.mxu0 0
    %491 = vmatpush1.bf16.msra.mxu0 0
    %492 = vmatprep.mubr.bf16.mxu0 0
    %493 = vmatmul.mubr.bf16.gmra.mrb[0].mxu0 0
    %v494 = vpop.f32.mrb[0].mxu0
    %v495 = vadd.f32 0.0, %v494
    %v496 = vpop.f32.mrb[0].mxu0
    %v497 = vpop.f32.mrb[0].mxu0
    %v498 = vpop.f32.mrb[0].mxu0
    %499 = vdwg.mxu0
    %v500 = vadd.f32 %v164, %v454
    %v501 = vadd.f32 %v166, %v456
    %v502 = vxor.u32 %v500, 2147483648
    %v503 = vxor.u32 %v501, 2147483648
    %v504 = vmul.f32 %v502, 1.442695
    %v505 = vpow.pop %v504
    %v506 = vmul.f32 %v503, 1.442695
    %v507 = vpow.pop %v506
    %v508 = vadd.f32 %v505, 1.0
    %v509 = vadd.f32 %v507, 1.0
    %v510 = vrcp.pop %v508
    %v511 = vmul.f32 1.0, %v510
    %v512 = vrcp.pop %v509
    %v513 = vmul.f32 1.0, %v512
    %v514 = vmul.f32 %v513, %v495
    %v515 = vadd.f32 %v217, %v514
    %v516 = vtanh.pop %v515
    %v517 = vsub.f32 1.0, %v511
    %v518 = vmul.f32 %v517, %v516
    %v519 = vmul.f32 %v511, 0.0
    %v520 = vadd.f32 %v518, %v519
    %v521 = vsel %vm255, %v520, 0.0
    %vm522 = vcmp.eq.f32.partialorder %v521, 0.0
    %v523 = vsel %vm522, -inf, %v521
    %v524 = vpack.c.bf16 %v521, %v521
    %525 = vmatprep.subr.bf16.mxu0 %v372
    %526 = vmatpush1.bf16.msra.mxu0 %v371
    %527 = vmatprep.subr.bf16.mxu0 %v375
    %528 = vmatpush1.bf16.msra.mxu0 %v374
    %529 = vmatprep.subr.bf16.mxu0 %v378
    %530 = vmatpush1.bf16.msra.mxu0 %v377
    %531 = vmatprep.subr.bf16.mxu0 %v381
    %532 = vmatpush1.bf16.msra.mxu0 %v380
    %533 = vmatprep.subr.bf16.mxu0 %v384
    %534 = vmatpush1.bf16.msra.mxu0 %v383
    %535 = vmatprep.subr.bf16.mxu0 %v387
    %536 = vmatpush1.bf16.msra.mxu0 %v386
    %537 = vmatprep.subr.bf16.mxu0 %v390
    %538 = vmatpush1.bf16.msra.mxu0 %v389
    %539 = vmatprep.subr.bf16.mxu0 %v393
    %540 = vmatpush1.bf16.msra.mxu0 %v392
    %541 = vmatprep.subr.bf16.mxu0 0
    %542 = vmatpush1.bf16.msra.mxu0 0
    %543 = vmatprep.subr.bf16.mxu0 0
    %544 = vmatpush1.bf16.msra.mxu0 0
    %545 = vmatprep.subr.bf16.mxu0 0
    %546 = vmatpush1.bf16.msra.mxu0 0
    %547 = vmatprep.subr.bf16.mxu0 0
    %548 = vmatpush1.bf16.msra.mxu0 0
    %549 = vmatprep.subr.bf16.mxu0 0
    %550 = vmatpush1.bf16.msra.mxu0 0
    %551 = vmatprep.subr.bf16.mxu0 0
    %552 = vmatpush1.bf16.msra.mxu0 0
    %553 = vmatprep.subr.bf16.mxu0 0
    %554 = vmatpush1.bf16.msra.mxu0 0
    %555 = vmatprep.subr.bf16.mxu0 0
    %556 = vmatpush1.bf16.msra.mxu0 0
    %557 = vmatprep.mubr.bf16.mxu0 0
    %558 = vmatmul.mubr.bf16.gmra.mrb[0].mxu0 %v524
    %v559 = vpop.f32.mrb[0].mxu0
    %v560 = vadd.f32 0.0, %v559
    %v561 = vpop.f32.mrb[0].mxu0
    %v562 = vadd.f32 0.0, %v561
    %v563 = vpop.f32.mrb[0].mxu0
    %v564 = vpop.f32.mrb[0].mxu0
    %565 = vdwg.mxu0
    %566 = vmatprep.subr.bf16.mxu0 0
    %567 = vmatpush1.bf16.msra.mxu0 %v373
    %568 = vmatprep.subr.bf16.mxu0 0
    %569 = vmatpush1.bf16.msra.mxu0 %v376
    %570 = vmatprep.subr.bf16.mxu0 0
    %571 = vmatpush1.bf16.msra.mxu0 %v379
    %572 = vmatprep.subr.bf16.mxu0 0
    %573 = vmatpush1.bf16.msra.mxu0 %v382
    %574 = vmatprep.subr.bf16.mxu0 0
    %575 = vmatpush1.bf16.msra.mxu0 %v385
    %576 = vmatprep.subr.bf16.mxu0 0
    %577 = vmatpush1.bf16.msra.mxu0 %v388
    %578 = vmatprep.subr.bf16.mxu0 0
    %579 = vmatpush1.bf16.msra.mxu0 %v391
    %580 = vmatprep.subr.bf16.mxu0 0
    %581 = vmatpush1.bf16.msra.mxu0 %v394
    %582 = vmatprep.subr.bf16.mxu0 0
    %583 = vmatpush1.bf16.msra.mxu0 0
    %584 = vmatprep.subr.bf16.mxu0 0
    %585 = vmatpush1.bf16.msra.mxu0 0
    %586 = vmatprep.subr.bf16.mxu0 0
    %587 = vmatpush1.bf16.msra.mxu0 0
    %588 = vmatprep.subr.bf16.mxu0 0
    %589 = vmatpush1.bf16.msra.mxu0 0
    %590 = vmatprep.subr.bf16.mxu0 0
    %591 = vmatpush1.bf16.msra.mxu0 0
    %592 = vmatprep.subr.bf16.mxu0 0
    %593 = vmatpush1.bf16.msra.mxu0 0
    %594 = vmatprep.subr.bf16.mxu0 0
    %595 = vmatpush1.bf16.msra.mxu0 0
    %596 = vmatprep.subr.bf16.mxu0 0
    %597 = vmatpush1.bf16.msra.mxu0 0
    %598 = vmatprep.mubr.bf16.mxu0 0
    %599 = vmatmul.mubr.bf16.gmra.mrb[0].mxu0 %v524
    %v600 = vpop.f32.mrb[0].mxu0
    %v601 = vadd.f32 0.0, %v600
    %v602 = vpop.f32.mrb[0].mxu0
    %v603 = vpop.f32.mrb[0].mxu0
    %v604 = vpop.f32.mrb[0].mxu0
    %605 = vdwg.mxu0
    %v608 = vrot.slane %v560, 4
    %v609 = vrot.slane %v562, 4
    %v612 = vadd.f32 %v164, %v608
    %v613 = vadd.f32 %v166, %v609
    %v614 = vxor.u32 %v612, 2147483648
    %v615 = vxor.u32 %v613, 2147483648
    %v616 = vmul.f32 %v614, 1.442695
    %v617 = vpow.pop %v616
    %v618 = vmul.f32 %v615, 1.442695
    %v619 = vpow.pop %v618
    %v620 = vadd.f32 %v617, 1.0
    %v621 = vadd.f32 %v619, 1.0
    %v622 = vrcp.pop %v620
    %v623 = vmul.f32 1.0, %v622
    %v624 = vrcp.pop %v621
    %v625 = vmul.f32 1.0, %v624
    %v627 = vrot.slane %v601, 4
    %v629 = vmul.f32 %v625, %v627
    %v630 = vadd.f32 %v217, %v629
    %v631 = vtanh.pop %v630
    %v632 = vsub.f32 1.0, %v623
    %v633 = vmul.f32 %v632, %v631
    %v635 = vrot.slane %v521, 4
    %v637 = vmul.f32 %v623, %v635
    %v638 = vadd.f32 %v633, %v637
    %v639 = vsel %vm255, %v638, %v635
    %v640 = vsel %vm255, %v638, 0.0
    %vm641 = vcmp.eq.f32.partialorder %v640, 0.0
    %v642 = vsel %vm641, -inf, %v640
    %v644 = vrot.slane %v642, 4
    %v646 = vmax.f32 %v523, %v644
    %v647 = vpack.c.bf16 %v639, %v639
    %v649 = vrot.slane %v647, 2
    %651 = vmatprep.subr.bf16.mxu0 %v372
    %652 = vmatpush1.bf16.msra.mxu0 %v371
    %653 = vmatprep.subr.bf16.mxu0 %v375
    %654 = vmatpush1.bf16.msra.mxu0 %v374
    %655 = vmatprep.subr.bf16.mxu0 %v378
    %656 = vmatpush1.bf16.msra.mxu0 %v377
    %657 = vmatprep.subr.bf16.mxu0 %v381
    %658 = vmatpush1.bf16.msra.mxu0 %v380
    %659 = vmatprep.subr.bf16.mxu0 %v384
    %660 = vmatpush1.bf16.msra.mxu0 %v383
    %661 = vmatprep.subr.bf16.mxu0 %v387
    %662 = vmatpush1.bf16.msra.mxu0 %v386
    %663 = vmatprep.subr.bf16.mxu0 %v390
    %664 = vmatpush1.bf16.msra.mxu0 %v389
    %665 = vmatprep.subr.bf16.mxu0 %v393
    %666 = vmatpush1.bf16.msra.mxu0 %v392
    %667 = vmatprep.subr.bf16.mxu0 0
    %668 = vmatpush1.bf16.msra.mxu0 0
    %669 = vmatprep.subr.bf16.mxu0 0
    %670 = vmatpush1.bf16.msra.mxu0 0
    %671 = vmatprep.subr.bf16.mxu0 0
    %672 = vmatpush1.bf16.msra.mxu0 0
    %673 = vmatprep.subr.bf16.mxu0 0
    %674 = vmatpush1.bf16.msra.mxu0 0
    %675 = vmatprep.subr.bf16.mxu0 0
    %676 = vmatpush1.bf16.msra.mxu0 0
    %677 = vmatprep.subr.bf16.mxu0 0
    %678 = vmatpush1.bf16.msra.mxu0 0
    %679 = vmatprep.subr.bf16.mxu0 0
    %680 = vmatpush1.bf16.msra.mxu0 0
    %681 = vmatprep.subr.bf16.mxu0 0
    %682 = vmatpush1.bf16.msra.mxu0 0
    %683 = vmatprep.mubr.bf16.mxu0 0
    %684 = vmatmul.mubr.bf16.gmra.mrb[0].mxu0 %v649
    %v685 = vpop.f32.mrb[0].mxu0
    %v686 = vadd.f32 0.0, %v685
    %v687 = vpop.f32.mrb[0].mxu0
    %v688 = vadd.f32 0.0, %v687
    %v689 = vpop.f32.mrb[0].mxu0
    %v690 = vpop.f32.mrb[0].mxu0
    %691 = vdwg.mxu0
    %692 = vmatprep.subr.bf16.mxu0 0
    %693 = vmatpush1.bf16.msra.mxu0 %v373
    %694 = vmatprep.subr.bf16.mxu0 0
    %695 = vmatpush1.bf16.msra.mxu0 %v376
    %696 = vmatprep.subr.bf16.mxu0 0
    %697 = vmatpush1.bf16.msra.mxu0 %v379
    %698 = vmatprep.subr.bf16.mxu0 0
    %699 = vmatpush1.bf16.msra.mxu0 %v382
    %700 = vmatprep.subr.bf16.mxu0 0
    %701 = vmatpush1.bf16.msra.mxu0 %v385
    %702 = vmatprep.subr.bf16.mxu0 0
    %703 = vmatpush1.bf16.msra.mxu0 %v388
    %704 = vmatprep.subr.bf16.mxu0 0
    %705 = vmatpush1.bf16.msra.mxu0 %v391
    %706 = vmatprep.subr.bf16.mxu0 0
    %707 = vmatpush1.bf16.msra.mxu0 %v394
    %708 = vmatprep.subr.bf16.mxu0 0
    %709 = vmatpush1.bf16.msra.mxu0 0
    %710 = vmatprep.subr.bf16.mxu0 0
    %711 = vmatpush1.bf16.msra.mxu0 0
    %712 = vmatprep.subr.bf16.mxu0 0
    %713 = vmatpush1.bf16.msra.mxu0 0
    %714 = vmatprep.subr.bf16.mxu0 0
    %715 = vmatpush1.bf16.msra.mxu0 0
    %716 = vmatprep.subr.bf16.mxu0 0
    %717 = vmatpush1.bf16.msra.mxu0 0
    %718 = vmatprep.subr.bf16.mxu0 0
    %719 = vmatpush1.bf16.msra.mxu0 0
    %720 = vmatprep.subr.bf16.mxu0 0
    %721 = vmatpush1.bf16.msra.mxu0 0
    %722 = vmatprep.subr.bf16.mxu0 0
    %723 = vmatpush1.bf16.msra.mxu0 0
    %724 = vmatprep.mubr.bf16.mxu0 0
    %725 = vmatmul.mubr.bf16.gmra.mrb[0].mxu0 %v649
    %v726 = vpop.f32.mrb[0].mxu0
    %v727 = vadd.f32 0.0, %v726
    %v728 = vpop.f32.mrb[0].mxu0
    %v729 = vpop.f32.mrb[0].mxu0
    %v730 = vpop.f32.mrb[0].mxu0
    %731 = vdwg.mxu0
    %v732 = vadd.f32 %v168, %v686
    %v733 = vadd.f32 %v170, %v688
    %v734 = vxor.u32 %v732, 2147483648
    %v735 = vxor.u32 %v733, 2147483648
    %v736 = vmul.f32 %v734, 1.442695
    %v737 = vpow.pop %v736
    %v738 = vmul.f32 %v735, 1.442695
    %v739 = vpow.pop %v738
    %v740 = vadd.f32 %v737, 1.0
    %v741 = vadd.f32 %v739, 1.0
    %v742 = vrcp.pop %v740
    %v743 = vmul.f32 1.0, %v742
    %v744 = vrcp.pop %v741
    %v745 = vmul.f32 1.0, %v744
    %v746 = vmul.f32 %v745, %v727
    %v747 = vadd.f32 %v220, %v746
    %v748 = vtanh.pop %v747
    %v749 = vsub.f32 1.0, %v743
    %v750 = vmul.f32 %v749, %v748
    %v752 = vrot.slane %v639, 4
    %v754 = vmul.f32 %v743, %v752
    %v755 = vadd.f32 %v750, %v754
    %v756 = vsel %vm256, %v755, %v752
    %v757 = vsel %vm256, %v755, 0.0
    %vm758 = vcmp.eq.f32.partialorder %v757, 0.0
    %v759 = vsel %vm758, -inf, %v757
    %v760 = vmax.f32 %v646, %v759
    %v761 = vpack.c.bf16 %v756, %v756
    %762 = vmatprep.subr.bf16.mxu0 %v372
    %763 = vmatpush1.bf16.msra.mxu0 %v371
    %764 = vmatprep.subr.bf16.mxu0 %v375
    %765 = vmatpush1.bf16.msra.mxu0 %v374
    %766 = vmatprep.subr.bf16.mxu0 %v378
    %767 = vmatpush1.bf16.msra.mxu0 %v377
    %768 = vmatprep.subr.bf16.mxu0 %v381
    %769 = vmatpush1.bf16.msra.mxu0 %v380
    %770 = vmatprep.subr.bf16.mxu0 %v384
    %771 = vmatpush1.bf16.msra.mxu0 %v383
    %772 = vmatprep.subr.bf16.mxu0 %v387
    %773 = vmatpush1.bf16.msra.mxu0 %v386
    %774 = vmatprep.subr.bf16.mxu0 %v390
    %775 = vmatpush1.bf16.msra.mxu0 %v389
    %776 = vmatprep.subr.bf16.mxu0 %v393
    %777 = vmatpush1.bf16.msra.mxu0 %v392
    %778 = vmatprep.subr.bf16.mxu0 0
    %779 = vmatpush1.bf16.msra.mxu0 0
    %780 = vmatprep.subr.bf16.mxu0 0
    %781 = vmatpush1.bf16.msra.mxu0 0
    %782 = vmatprep.subr.bf16.mxu0 0
    %783 = vmatpush1.bf16.msra.mxu0 0
    %784 = vmatprep.subr.bf16.mxu0 0
    %785 = vmatpush1.bf16.msra.mxu0 0
    %786 = vmatprep.subr.bf16.mxu0 0
    %787 = vmatpush1.bf16.msra.mxu0 0
    %788 = vmatprep.subr.bf16.mxu0 0
    %789 = vmatpush1.bf16.msra.mxu0 0
    %790 = vmatprep.subr.bf16.mxu0 0
    %791 = vmatpush1.bf16.msra.mxu0 0
    %792 = vmatprep.subr.bf16.mxu0 0
    %793 = vmatpush1.bf16.msra.mxu0 0
    %794 = vmatprep.mubr.bf16.mxu0 0
    %795 = vmatmul.mubr.bf16.gmra.mrb[0].mxu0 %v761
    %v796 = vpop.f32.mrb[0].mxu0
    %v797 = vadd.f32 0.0, %v796
    %v798 = vpop.f32.mrb[0].mxu0
    %v799 = vadd.f32 0.0, %v798
    %v800 = vpop.f32.mrb[0].mxu0
    %v801 = vpop.f32.mrb[0].mxu0
    %802 = vdwg.mxu0
    %803 = vmatprep.subr.bf16.mxu0 0
    %804 = vmatpush1.bf16.msra.mxu0 %v373
    %805 = vmatprep.subr.bf16.mxu0 0
    %806 = vmatpush1.bf16.msra.mxu0 %v376
    %807 = vmatprep.subr.bf16.mxu0 0
    %808 = vmatpush1.bf16.msra.mxu0 %v379
    %809 = vmatprep.subr.bf16.mxu0 0
    %810 = vmatpush1.bf16.msra.mxu0 %v382
    %811 = vmatprep.subr.bf16.mxu0 0
    %812 = vmatpush1.bf16.msra.mxu0 %v385
    %813 = vmatprep.subr.bf16.mxu0 0
    %814 = vmatpush1.bf16.msra.mxu0 %v388
    %815 = vmatprep.subr.bf16.mxu0 0
    %816 = vmatpush1.bf16.msra.mxu0 %v391
    %817 = vmatprep.subr.bf16.mxu0 0
    %818 = vmatpush1.bf16.msra.mxu0 %v394
    %819 = vmatprep.subr.bf16.mxu0 0
    %820 = vmatpush1.bf16.msra.mxu0 0
    %821 = vmatprep.subr.bf16.mxu0 0
    %822 = vmatpush1.bf16.msra.mxu0 0
    %823 = vmatprep.subr.bf16.mxu0 0
    %824 = vmatpush1.bf16.msra.mxu0 0
    %825 = vmatprep.subr.bf16.mxu0 0
    %826 = vmatpush1.bf16.msra.mxu0 0
    %827 = vmatprep.subr.bf16.mxu0 0
    %828 = vmatpush1.bf16.msra.mxu0 0
    %829 = vmatprep.subr.bf16.mxu0 0
    %830 = vmatpush1.bf16.msra.mxu0 0
    %831 = vmatprep.subr.bf16.mxu0 0
    %832 = vmatpush1.bf16.msra.mxu0 0
    %833 = vmatprep.subr.bf16.mxu0 0
    %834 = vmatpush1.bf16.msra.mxu0 0
    %835 = vmatprep.mubr.bf16.mxu0 0
    %836 = vmatmul.mubr.bf16.gmra.mrb[0].mxu0 %v761
    %v837 = vpop.f32.mrb[0].mxu0
    %v838 = vadd.f32 0.0, %v837
    %v839 = vpop.f32.mrb[0].mxu0
    %v840 = vpop.f32.mrb[0].mxu0
    %v841 = vpop.f32.mrb[0].mxu0
    %842 = vdwg.mxu0
    %v845 = vrot.slane %v797, 4
    %v846 = vrot.slane %v799, 4
    %v849 = vadd.f32 %v168, %v845
    %v850 = vadd.f32 %v170, %v846
    %v851 = vxor.u32 %v849, 2147483648
    %v852 = vxor.u32 %v850, 2147483648
    %v853 = vmul.f32 %v851, 1.442695
    %v854 = vpow.pop %v853
    %v855 = vmul.f32 %v852, 1.442695
    %v856 = vpow.pop %v855
    %v857 = vadd.f32 %v854, 1.0
    %v858 = vadd.f32 %v856, 1.0
    %v859 = vrcp.pop %v857
    %v860 = vmul.f32 1.0, %v859
    %v861 = vrcp.pop %v858
    %v862 = vmul.f32 1.0, %v861
    %v864 = vrot.slane %v838, 4
    %v866 = vmul.f32 %v862, %v864
    %v867 = vadd.f32 %v220, %v866
    %v868 = vtanh.pop %v867
    %v869 = vsub.f32 1.0, %v860
    %v870 = vmul.f32 %v869, %v868
    %v872 = vrot.slane %v756, 4
    %v874 = vmul.f32 %v860, %v872
    %v875 = vadd.f32 %v870, %v874
    %v876 = vsel %vm256, %v875, %v872
    %v877 = vsel %vm256, %v875, 0.0
    %vm878 = vcmp.eq.f32.partialorder %v877, 0.0
    %v879 = vsel %vm878, -inf, %v877
    %v881 = vrot.slane %v879, 4
    %v883 = vmax.f32 %v760, %v881
    %v884 = vpack.c.bf16 %v876, %v876
    %v886 = vrot.slane %v884, 2
    %888 = vmatprep.subr.bf16.mxu0 %v372
    %889 = vmatpush1.bf16.msra.mxu0 %v371
    %890 = vmatprep.subr.bf16.mxu0 %v375
    %891 = vmatpush1.bf16.msra.mxu0 %v374
    %892 = vmatprep.subr.bf16.mxu0 %v378
    %893 = vmatpush1.bf16.msra.mxu0 %v377
    %894 = vmatprep.subr.bf16.mxu0 %v381
    %895 = vmatpush1.bf16.msra.mxu0 %v380
    %896 = vmatprep.subr.bf16.mxu0 %v384
    %897 = vmatpush1.bf16.msra.mxu0 %v383
    %898 = vmatprep.subr.bf16.mxu0 %v387
    %899 = vmatpush1.bf16.msra.mxu0 %v386
    %900 = vmatprep.subr.bf16.mxu0 %v390
    %901 = vmatpush1.bf16.msra.mxu0 %v389
    %902 = vmatprep.subr.bf16.mxu0 %v393
    %903 = vmatpush1.bf16.msra.mxu0 %v392
    %904 = vmatprep.subr.bf16.mxu0 0
    %905 = vmatpush1.bf16.msra.mxu0 0
    %906 = vmatprep.subr.bf16.mxu0 0
    %907 = vmatpush1.bf16.msra.mxu0 0
    %908 = vmatprep.subr.bf16.mxu0 0
    %909 = vmatpush1.bf16.msra.mxu0 0
    %910 = vmatprep.subr.bf16.mxu0 0
    %911 = vmatpush1.bf16.msra.mxu0 0
    %912 = vmatprep.subr.bf16.mxu0 0
    %913 = vmatpush1.bf16.msra.mxu0 0
    %914 = vmatprep.subr.bf16.mxu0 0
    %915 = vmatpush1.bf16.msra.mxu0 0
    %916 = vmatprep.subr.bf16.mxu0 0
    %917 = vmatpush1.bf16.msra.mxu0 0
    %918 = vmatprep.subr.bf16.mxu0 0
    %919 = vmatpush1.bf16.msra.mxu0 0
    %920 = vmatprep.mubr.bf16.mxu0 0
    %921 = vmatmul.mubr.bf16.gmra.mrb[0].mxu0 %v886
    %v922 = vpop.f32.mrb[0].mxu0
    %v923 = vadd.f32 0.0, %v922
    %v924 = vpop.f32.mrb[0].mxu0
    %v925 = vadd.f32 0.0, %v924
    %v926 = vpop.f32.mrb[0].mxu0
    %v927 = vpop.f32.mrb[0].mxu0
    %928 = vdwg.mxu0
    %929 = vmatprep.subr.bf16.mxu0 0
    %930 = vmatpush1.bf16.msra.mxu0 %v373
    %931 = vmatprep.subr.bf16.mxu0 0
    %932 = vmatpush1.bf16.msra.mxu0 %v376
    %933 = vmatprep.subr.bf16.mxu0 0
    %934 = vmatpush1.bf16.msra.mxu0 %v379
    %935 = vmatprep.subr.bf16.mxu0 0
    %936 = vmatpush1.bf16.msra.mxu0 %v382
    %937 = vmatprep.subr.bf16.mxu0 0
    %938 = vmatpush1.bf16.msra.mxu0 %v385
    %939 = vmatprep.subr.bf16.mxu0 0
    %940 = vmatpush1.bf16.msra.mxu0 %v388
    %941 = vmatprep.subr.bf16.mxu0 0
    %942 = vmatpush1.bf16.msra.mxu0 %v391
    %943 = vmatprep.subr.bf16.mxu0 0
    %944 = vmatpush1.bf16.msra.mxu0 %v394
    %945 = vmatprep.subr.bf16.mxu0 0
    %946 = vmatpush1.bf16.msra.mxu0 0
    %947 = vmatprep.subr.bf16.mxu0 0
    %948 = vmatpush1.bf16.msra.mxu0 0
    %949 = vmatprep.subr.bf16.mxu0 0
    %950 = vmatpush1.bf16.msra.mxu0 0
    %951 = vmatprep.subr.bf16.mxu0 0
    %952 = vmatpush1.bf16.msra.mxu0 0
    %953 = vmatprep.subr.bf16.mxu0 0
    %954 = vmatpush1.bf16.msra.mxu0 0
    %955 = vmatprep.subr.bf16.mxu0 0
    %956 = vmatpush1.bf16.msra.mxu0 0
    %957 = vmatprep.subr.bf16.mxu0 0
    %958 = vmatpush1.bf16.msra.mxu0 0
    %959 = vmatprep.subr.bf16.mxu0 0
    %960 = vmatpush1.bf16.msra.mxu0 0
    %961 = vmatprep.mubr.bf16.mxu0 0
    %962 = vmatmul.mubr.bf16.gmra.mrb[0].mxu0 %v886
    %v963 = vpop.f32.mrb[0].mxu0
    %v964 = vadd.f32 0.0, %v963
    %v965 = vpop.f32.mrb[0].mxu0
    %v966 = vpop.f32.mrb[0].mxu0
    %v967 = vpop.f32.mrb[0].mxu0
    %968 = vdwg.mxu0
    %v969 = vadd.f32 %v174, %v923
    %v970 = vadd.f32 %v176, %v925
    %v971 = vxor.u32 %v969, 2147483648
    %v972 = vxor.u32 %v970, 2147483648
    %v973 = vmul.f32 %v971, 1.442695
    %v974 = vpow.pop %v973
    %v975 = vmul.f32 %v972, 1.442695
    %v976 = vpow.pop %v975
    %v977 = vadd.f32 %v974, 1.0
    %v978 = vadd.f32 %v976, 1.0
    %v979 = vrcp.pop %v977
    %v980 = vmul.f32 1.0, %v979
    %v981 = vrcp.pop %v978
    %v982 = vmul.f32 1.0, %v981
    %v983 = vmul.f32 %v982, %v964
    %v984 = vadd.f32 %v225, %v983
    %v985 = vtanh.pop %v984
    %v986 = vsub.f32 1.0, %v980
    %v987 = vmul.f32 %v986, %v985
    %v989 = vrot.slane %v876, 4
    %v991 = vmul.f32 %v980, %v989
    %v992 = vadd.f32 %v987, %v991
    %v993 = vsel %vm257, %v992, %v989
    %v994 = vsel %vm257, %v992, 0.0
    %vm995 = vcmp.eq.f32.partialorder %v994, 0.0
    %v996 = vsel %vm995, -inf, %v994
    %v997 = vmax.f32 %v883, %v996
    %v998 = vpack.c.bf16 %v993, %v993
    %999 = vmatprep.subr.bf16.mxu0 %v372
    %1000 = vmatpush1.bf16.msra.mxu0 %v371
    %1001 = vmatprep.subr.bf16.mxu0 %v375
    %1002 = vmatpush1.bf16.msra.mxu0 %v374
    %1003 = vmatprep.subr.bf16.mxu0 %v378
    %1004 = vmatpush1.bf16.msra.mxu0 %v377
    %1005 = vmatprep.subr.bf16.mxu0 %v381
    %1006 = vmatpush1.bf16.msra.mxu0 %v380
    %1007 = vmatprep.subr.bf16.mxu0 %v384
    %1008 = vmatpush1.bf16.msra.mxu0 %v383
    %1009 = vmatprep.subr.bf16.mxu0 %v387
    %1010 = vmatpush1.bf16.msra.mxu0 %v386
    %1011 = vmatprep.subr.bf16.mxu0 %v390
    %1012 = vmatpush1.bf16.msra.mxu0 %v389
    %1013 = vmatprep.subr.bf16.mxu0 %v393
    %1014 = vmatpush1.bf16.msra.mxu0 %v392
    %1015 = vmatprep.subr.bf16.mxu0 0
    %1016 = vmatpush1.bf16.msra.mxu0 0
    %1017 = vmatprep.subr.bf16.mxu0 0
    %1018 = vmatpush1.bf16.msra.mxu0 0
    %1019 = vmatprep.subr.bf16.mxu0 0
    %1020 = vmatpush1.bf16.msra.mxu0 0
    %1021 = vmatprep.subr.bf16.mxu0 0
    %1022 = vmatpush1.bf16.msra.mxu0 0
    %1023 = vmatprep.subr.bf16.mxu0 0
    %1024 = vmatpush1.bf16.msra.mxu0 0
    %1025 = vmatprep.subr.bf16.mxu0 0
    %1026 = vmatpush1.bf16.msra.mxu0 0
    %1027 = vmatprep.subr.bf16.mxu0 0
    %1028 = vmatpush1.bf16.msra.mxu0 0
    %1029 = vmatprep.subr.bf16.mxu0 0
    %1030 = vmatpush1.bf16.msra.mxu0 0
    %1031 = vmatprep.mubr.bf16.mxu0 0
    %1032 = vmatmul.mubr.bf16.gmra.mrb[0].mxu0 %v998
    %v1033 = vpop.f32.mrb[0].mxu0
    %v1034 = vadd.f32 0.0, %v1033
    %v1035 = vpop.f32.mrb[0].mxu0
    %v1036 = vadd.f32 0.0, %v1035
    %v1037 = vpop.f32.mrb[0].mxu0
    %v1038 = vpop.f32.mrb[0].mxu0
    %1039 = vdwg.mxu0
    %1040 = vmatprep.subr.bf16.mxu0 0
    %1041 = vmatpush1.bf16.msra.mxu0 %v373
    %1042 = vmatprep.subr.bf16.mxu0 0
    %1043 = vmatpush1.bf16.msra.mxu0 %v376
    %1044 = vmatprep.subr.bf16.mxu0 0
    %1045 = vmatpush1.bf16.msra.mxu0 %v379
    %1046 = vmatprep.subr.bf16.mxu0 0
    %1047 = vmatpush1.bf16.msra.mxu0 %v382
    %1048 = vmatprep.subr.bf16.mxu0 0
    %1049 = vmatpush1.bf16.msra.mxu0 %v385
    %1050 = vmatprep.subr.bf16.mxu0 0
    %1051 = vmatpush1.bf16.msra.mxu0 %v388
    %1052 = vmatprep.subr.bf16.mxu0 0
    %1053 = vmatpush1.bf16.msra.mxu0 %v391
    %1054 = vmatprep.subr.bf16.mxu0 0
    %1055 = vmatpush1.bf16.msra.mxu0 %v394
    %1056 = vmatprep.subr.bf16.mxu0 0
    %1057 = vmatpush1.bf16.msra.mxu0 0
    %1058 = vmatprep.subr.bf16.mxu0 0
    %1059 = vmatpush1.bf16.msra.mxu0 0
    %1060 = vmatprep.subr.bf16.mxu0 0
    %1061 = vmatpush1.bf16.msra.mxu0 0
    %1062 = vmatprep.subr.bf16.mxu0 0
    %1063 = vmatpush1.bf16.msra.mxu0 0
    %1064 = vmatprep.subr.bf16.mxu0 0
    %1065 = vmatpush1.bf16.msra.mxu0 0
    %1066 = vmatprep.subr.bf16.mxu0 0
    %1067 = vmatpush1.bf16.msra.mxu0 0
    %1068 = vmatprep.subr.bf16.mxu0 0
    %1069 = vmatpush1.bf16.msra.mxu0 0
    %1070 = vmatprep.subr.bf16.mxu0 0
    %1071 = vmatpush1.bf16.msra.mxu0 0
    %1072 = vmatprep.mubr.bf16.mxu0 0
    %1073 = vmatmul.mubr.bf16.gmra.mrb[0].mxu0 %v998
    %v1074 = vpop.f32.mrb[0].mxu0
    %v1075 = vadd.f32 0.0, %v1074
    %v1076 = vpop.f32.mrb[0].mxu0
    %v1077 = vpop.f32.mrb[0].mxu0
    %v1078 = vpop.f32.mrb[0].mxu0
    %1079 = vdwg.mxu0
    %v1082 = vrot.slane %v1034, 4
    %v1083 = vrot.slane %v1036, 4
    %v1086 = vadd.f32 %v174, %v1082
    %v1087 = vadd.f32 %v176, %v1083
    %v1088 = vxor.u32 %v1086, 2147483648
    %v1089 = vxor.u32 %v1087, 2147483648
    %v1090 = vmul.f32 %v1088, 1.442695
    %v1091 = vpow.pop %v1090
    %v1092 = vmul.f32 %v1089, 1.442695
    %v1093 = vpow.pop %v1092
    %v1094 = vadd.f32 %v1091, 1.0
    %v1095 = vadd.f32 %v1093, 1.0
    %v1096 = vrcp.pop %v1094
    %v1097 = vmul.f32 1.0, %v1096
    %v1098 = vrcp.pop %v1095
    %v1099 = vmul.f32 1.0, %v1098
    %v1101 = vrot.slane %v1075, 4
    %v1103 = vmul.f32 %v1099, %v1101
    %v1104 = vadd.f32 %v225, %v1103
    %v1105 = vtanh.pop %v1104
    %v1106 = vsub.f32 1.0, %v1097
    %v1107 = vmul.f32 %v1106, %v1105
    %v1109 = vrot.slane %v993, 4
    %v1111 = vmul.f32 %v1097, %v1109
    %v1112 = vadd.f32 %v1107, %v1111
    %v1113 = vsel %vm257, %v1112, %v1109
    %v1114 = vsel %vm257, %v1112, 0.0
    %vm1115 = vcmp.eq.f32.partialorder %v1114, 0.0
    %v1116 = vsel %vm1115, -inf, %v1114
    %v1118 = vrot.slane %v1116, 4
    %v1120 = vmax.f32 %v997, %v1118
    %v1121 = vpack.c.bf16 %v1113, %v1113
    %v1123 = vrot.slane %v1121, 2
    %1125 = vmatprep.subr.bf16.mxu0 %v372
    %1126 = vmatpush1.bf16.msra.mxu0 %v371
    %1127 = vmatprep.subr.bf16.mxu0 %v375
    %1128 = vmatpush1.bf16.msra.mxu0 %v374
    %1129 = vmatprep.subr.bf16.mxu0 %v378
    %1130 = vmatpush1.bf16.msra.mxu0 %v377
    %1131 = vmatprep.subr.bf16.mxu0 %v381
    %1132 = vmatpush1.bf16.msra.mxu0 %v380
    %1133 = vmatprep.subr.bf16.mxu0 %v384
    %1134 = vmatpush1.bf16.msra.mxu0 %v383
    %1135 = vmatprep.subr.bf16.mxu0 %v387
    %1136 = vmatpush1.bf16.msra.mxu0 %v386
    %1137 = vmatprep.subr.bf16.mxu0 %v390
    %1138 = vmatpush1.bf16.msra.mxu0 %v389
    %1139 = vmatprep.subr.bf16.mxu0 %v393
    %1140 = vmatpush1.bf16.msra.mxu0 %v392
    %1141 = vmatprep.subr.bf16.mxu0 0
    %1142 = vmatpush1.bf16.msra.mxu0 0
    %1143 = vmatprep.subr.bf16.mxu0 0
    %1144 = vmatpush1.bf16.msra.mxu0 0
    %1145 = vmatprep.subr.bf16.mxu0 0
    %1146 = vmatpush1.bf16.msra.mxu0 0
    %1147 = vmatprep.subr.bf16.mxu0 0
    %1148 = vmatpush1.bf16.msra.mxu0 0
    %1149 = vmatprep.subr.bf16.mxu0 0
    %1150 = vmatpush1.bf16.msra.mxu0 0
    %1151 = vmatprep.subr.bf16.mxu0 0
    %1152 = vmatpush1.bf16.msra.mxu0 0
    %1153 = vmatprep.subr.bf16.mxu0 0
    %1154 = vmatpush1.bf16.msra.mxu0 0
    %1155 = vmatprep.subr.bf16.mxu0 0
    %1156 = vmatpush1.bf16.msra.mxu0 0
    %1157 = vmatprep.mubr.bf16.mxu0 0
    %1158 = vmatmul.mubr.bf16.gmra.mrb[0].mxu0 %v1123
    %v1159 = vpop.f32.mrb[0].mxu0
    %v1160 = vadd.f32 0.0, %v1159
    %v1161 = vpop.f32.mrb[0].mxu0
    %v1162 = vadd.f32 0.0, %v1161
    %v1163 = vpop.f32.mrb[0].mxu0
    %v1164 = vpop.f32.mrb[0].mxu0
    %1165 = vdwg.mxu0
    %1166 = vmatprep.subr.bf16.mxu0 0
    %1167 = vmatpush1.bf16.msra.mxu0 %v373
    %1168 = vmatprep.subr.bf16.mxu0 0
    %1169 = vmatpush1.bf16.msra.mxu0 %v376
    %1170 = vmatprep.subr.bf16.mxu0 0
    %1171 = vmatpush1.bf16.msra.mxu0 %v379
    %1172 = vmatprep.subr.bf16.mxu0 0
    %1173 = vmatpush1.bf16.msra.mxu0 %v382
    %1174 = vmatprep.subr.bf16.mxu0 0
    %1175 = vmatpush1.bf16.msra.mxu0 %v385
    %1176 = vmatprep.subr.bf16.mxu0 0
    %1177 = vmatpush1.bf16.msra.mxu0 %v388
    %1178 = vmatprep.subr.bf16.mxu0 0
    %1179 = vmatpush1.bf16.msra.mxu0 %v391
    %1180 = vmatprep.subr.bf16.mxu0 0
    %1181 = vmatpush1.bf16.msra.mxu0 %v394
    %1182 = vmatprep.subr.bf16.mxu0 0
    %1183 = vmatpush1.bf16.msra.mxu0 0
    %1184 = vmatprep.subr.bf16.mxu0 0
    %1185 = vmatpush1.bf16.msra.mxu0 0
    %1186 = vmatprep.subr.bf16.mxu0 0
    %1187 = vmatpush1.bf16.msra.mxu0 0
    %1188 = vmatprep.subr.bf16.mxu0 0
    %1189 = vmatpush1.bf16.msra.mxu0 0
    %1190 = vmatprep.subr.bf16.mxu0 0
    %1191 = vmatpush1.bf16.msra.mxu0 0
    %1192 = vmatprep.subr.bf16.mxu0 0
    %1193 = vmatpush1.bf16.msra.mxu0 0
    %1194 = vmatprep.subr.bf16.mxu0 0
    %1195 = vmatpush1.bf16.msra.mxu0 0
    %1196 = vmatprep.subr.bf16.mxu0 0
    %1197 = vmatpush1.bf16.msra.mxu0 0
    %1198 = vmatprep.mubr.bf16.mxu0 0
    %1199 = vmatmul.mubr.bf16.gmra.mrb[0].mxu0 %v1123
    %v1200 = vpop.f32.mrb[0].mxu0
    %v1201 = vadd.f32 0.0, %v1200
    %v1202 = vpop.f32.mrb[0].mxu0
    %v1203 = vpop.f32.mrb[0].mxu0
    %v1204 = vpop.f32.mrb[0].mxu0
    %1205 = vdwg.mxu0
    %v1206 = vadd.f32 %v178, %v1160
    %v1207 = vadd.f32 %v180, %v1162
    %v1208 = vxor.u32 %v1206, 2147483648
    %v1209 = vxor.u32 %v1207, 2147483648
    %v1210 = vmul.f32 %v1208, 1.442695
    %v1211 = vpow.pop %v1210
    %v1212 = vmul.f32 %v1209, 1.442695
    %v1213 = vpow.pop %v1212
    %v1214 = vadd.f32 %v1211, 1.0
    %v1215 = vadd.f32 %v1213, 1.0
    %v1216 = vrcp.pop %v1214
    %v1217 = vmul.f32 1.0, %v1216
    %v1218 = vrcp.pop %v1215
    %v1219 = vmul.f32 1.0, %v1218
    %v1220 = vmul.f32 %v1219, %v1201
    %v1221 = vadd.f32 %v228, %v1220
    %v1222 = vtanh.pop %v1221
    %v1223 = vsub.f32 1.0, %v1217
    %v1224 = vmul.f32 %v1223, %v1222
    %v1226 = vrot.slane %v1113, 4
    %v1228 = vmul.f32 %v1217, %v1226
    %v1229 = vadd.f32 %v1224, %v1228
    %v1230 = vsel %vm258, %v1229, %v1226
    %v1231 = vsel %vm258, %v1229, 0.0
    %vm1232 = vcmp.eq.f32.partialorder %v1231, 0.0
    %v1233 = vsel %vm1232, -inf, %v1231
    %v1234 = vmax.f32 %v1120, %v1233
    %v1235 = vpack.c.bf16 %v1230, %v1230
    %1236 = vmatprep.subr.bf16.mxu0 %v372
    %1237 = vmatpush1.bf16.msra.mxu0 %v371
    %1238 = vmatprep.subr.bf16.mxu0 %v375
    %1239 = vmatpush1.bf16.msra.mxu0 %v374
    %1240 = vmatprep.subr.bf16.mxu0 %v378
    %1241 = vmatpush1.bf16.msra.mxu0 %v377
    %1242 = vmatprep.subr.bf16.mxu0 %v381
    %1243 = vmatpush1.bf16.msra.mxu0 %v380
    %1244 = vmatprep.subr.bf16.mxu0 %v384
    %1245 = vmatpush1.bf16.msra.mxu0 %v383
    %1246 = vmatprep.subr.bf16.mxu0 %v387
    %1247 = vmatpush1.bf16.msra.mxu0 %v386
    %1248 = vmatprep.subr.bf16.mxu0 %v390
    %1249 = vmatpush1.bf16.msra.mxu0 %v389
    %1250 = vmatprep.subr.bf16.mxu0 %v393
    %1251 = vmatpush1.bf16.msra.mxu0 %v392
    %1252 = vmatprep.subr.bf16.mxu0 0
    %1253 = vmatpush1.bf16.msra.mxu0 0
    %1254 = vmatprep.subr.bf16.mxu0 0
    %1255 = vmatpush1.bf16.msra.mxu0 0
    %1256 = vmatprep.subr.bf16.mxu0 0
    %1257 = vmatpush1.bf16.msra.mxu0 0
    %1258 = vmatprep.subr.bf16.mxu0 0
    %1259 = vmatpush1.bf16.msra.mxu0 0
    %1260 = vmatprep.subr.bf16.mxu0 0
    %1261 = vmatpush1.bf16.msra.mxu0 0
    %1262 = vmatprep.subr.bf16.mxu0 0
    %1263 = vmatpush1.bf16.msra.mxu0 0
    %1264 = vmatprep.subr.bf16.mxu0 0
    %1265 = vmatpush1.bf16.msra.mxu0 0
    %1266 = vmatprep.subr.bf16.mxu0 0
    %1267 = vmatpush1.bf16.msra.mxu0 0
    %1268 = vmatprep.mubr.bf16.mxu0 0
    %1269 = vmatmul.mubr.bf16.gmra.mrb[0].mxu0 %v1235
    %v1270 = vpop.f32.mrb[0].mxu0
    %v1271 = vadd.f32 0.0, %v1270
    %v1272 = vpop.f32.mrb[0].mxu0
    %v1273 = vadd.f32 0.0, %v1272
    %v1274 = vpop.f32.mrb[0].mxu0
    %v1275 = vpop.f32.mrb[0].mxu0
    %1276 = vdwg.mxu0
    %1277 = vmatprep.subr.bf16.mxu0 0
    %1278 = vmatpush1.bf16.msra.mxu0 %v373
    %1279 = vmatprep.subr.bf16.mxu0 0
    %1280 = vmatpush1.bf16.msra.mxu0 %v376
    %1281 = vmatprep.subr.bf16.mxu0 0
    %1282 = vmatpush1.bf16.msra.mxu0 %v379
    %1283 = vmatprep.subr.bf16.mxu0 0
    %1284 = vmatpush1.bf16.msra.mxu0 %v382
    %1285 = vmatprep.subr.bf16.mxu0 0
    %1286 = vmatpush1.bf16.msra.mxu0 %v385
    %1287 = vmatprep.subr.bf16.mxu0 0
    %1288 = vmatpush1.bf16.msra.mxu0 %v388
    %1289 = vmatprep.subr.bf16.mxu0 0
    %1290 = vmatpush1.bf16.msra.mxu0 %v391
    %1291 = vmatprep.subr.bf16.mxu0 0
    %1292 = vmatpush1.bf16.msra.mxu0 %v394
    %1293 = vmatprep.subr.bf16.mxu0 0
    %1294 = vmatpush1.bf16.msra.mxu0 0
    %1295 = vmatprep.subr.bf16.mxu0 0
    %1296 = vmatpush1.bf16.msra.mxu0 0
    %1297 = vmatprep.subr.bf16.mxu0 0
    %1298 = vmatpush1.bf16.msra.mxu0 0
    %1299 = vmatprep.subr.bf16.mxu0 0
    %1300 = vmatpush1.bf16.msra.mxu0 0
    %1301 = vmatprep.subr.bf16.mxu0 0
    %1302 = vmatpush1.bf16.msra.mxu0 0
    %1303 = vmatprep.subr.bf16.mxu0 0
    %1304 = vmatpush1.bf16.msra.mxu0 0
    %1305 = vmatprep.subr.bf16.mxu0 0
    %1306 = vmatpush1.bf16.msra.mxu0 0
    %1307 = vmatprep.subr.bf16.mxu0 0
    %1308 = vmatpush1.bf16.msra.mxu0 0
    %1309 = vmatprep.mubr.bf16.mxu0 0
    %1310 = vmatmul.mubr.bf16.gmra.mrb[0].mxu0 %v1235
    %v1311 = vpop.f32.mrb[0].mxu0
    %v1312 = vadd.f32 0.0, %v1311
    %v1313 = vpop.f32.mrb[0].mxu0
    %v1314 = vpop.f32.mrb[0].mxu0
    %v1315 = vpop.f32.mrb[0].mxu0
    %1316 = vdwg.mxu0
    %v1319 = vrot.slane %v1271, 4
    %v1320 = vrot.slane %v1273, 4
    %v1323 = vadd.f32 %v178, %v1319
    %v1324 = vadd.f32 %v180, %v1320
    %v1325 = vxor.u32 %v1323, 2147483648
    %v1326 = vxor.u32 %v1324, 2147483648
    %v1327 = vmul.f32 %v1325, 1.442695
    %v1328 = vpow.pop %v1327
    %v1329 = vmul.f32 %v1326, 1.442695
    %v1330 = vpow.pop %v1329
    %v1331 = vadd.f32 %v1328, 1.0
    %v1332 = vadd.f32 %v1330, 1.0
    %v1333 = vrcp.pop %v1331
    %v1334 = vmul.f32 1.0, %v1333
    %v1335 = vrcp.pop %v1332
    %v1336 = vmul.f32 1.0, %v1335
    %v1338 = vrot.slane %v1312, 4
    %v1340 = vmul.f32 %v1336, %v1338
    %v1341 = vadd.f32 %v228, %v1340
    %v1342 = vtanh.pop %v1341
    %v1343 = vsub.f32 1.0, %v1334
    %v1344 = vmul.f32 %v1343, %v1342
    %v1346 = vrot.slane %v1230, 4
    %v1348 = vmul.f32 %v1334, %v1346
    %v1349 = vadd.f32 %v1344, %v1348
    %v1350 = vsel %vm258, %v1349, 0.0
    %vm1351 = vcmp.eq.f32.partialorder %v1350, 0.0
    %v1352 = vsel %vm1351, -inf, %v1350
    %v1354 = vrot.slane %v1352, 4
    %v1356 = vmax.f32 %v1234, %v1354
    %v1357 = vlaneseq
    %v1358 = vand.u32 %v1357, 127
    %vm1359 = vcmp.lt.s32.totalorder %v1358, 32
    %v1360 = vsel %vm1359, %v1356, 0.0
    %v1362 = vrot.slane %v1360, 2
    %v1364 = vsub.f32 %v1360, %v1362
    %v1365 = vand.u32 2147483647, %v1364
    %v1366 = vmul.f32 %v1360, %v1362
    %v1367 = vpack.c.bf16 %v1360, %v1360
    %v1368 = vpack.c.bf16 %v1362, %v1362
    %v1369 = vpack.c.bf16 %v1365, %v1365
    %v1370 = vpack.c.bf16 %v1366, %v1366
    %v1371 = vld [vmem:[%s5] sm:$0xf]
    %v1372 = vld [vmem:[%s5 + $0x4] sm:$0xf]
    %v1373 = vld [vmem:[%s5 + $0x8] sm:$0xf]
    %v1374 = vld [vmem:[%s5 + $0xc] sm:$0xf]
    %v1375 = vld [vmem:[%s5 + $0x10] sm:$0xf]
    %v1376 = vld [vmem:[%s5 + $0x14] sm:$0xf]
    %v1377 = vld [vmem:[%s5 + $0x18] sm:$0xf]
    %v1378 = vld [vmem:[%s5 + $0x1c] sm:$0xf]
    %v1379 = vld [vmem:[%s5 + $0x20] sm:$0xf]
    %v1380 = vld [vmem:[%s5 + $0x24] sm:$0xf]
    %v1381 = vld [vmem:[%s5 + $0x28] sm:$0xf]
    %v1382 = vld [vmem:[%s5 + $0x2c] sm:$0xf]
    %v1383 = vld [vmem:[%s5 + $0x30] sm:$0xf]
    %v1384 = vld [vmem:[%s5 + $0x34] sm:$0xf]
    %v1385 = vld [vmem:[%s5 + $0x38] sm:$0xf]
    %v1386 = vld [vmem:[%s5 + $0x3c] sm:$0xf]
    %v1387 = vld [vmem:[%s5 + $0x40] sm:$0xf]
    %v1388 = vld [vmem:[%s5 + $0x44] sm:$0xf]
    %v1389 = vld [vmem:[%s5 + $0x48] sm:$0xf]
    %v1390 = vld [vmem:[%s5 + $0x4c] sm:$0xf]
    %v1391 = vld [vmem:[%s5 + $0x50] sm:$0xf]
    %v1392 = vld [vmem:[%s5 + $0x54] sm:$0xf]
    %v1393 = vld [vmem:[%s5 + $0x58] sm:$0xf]
    %v1394 = vld [vmem:[%s5 + $0x5c] sm:$0xf]
    %v1395 = vld [vmem:[%s5 + $0x60] sm:$0xf]
    %v1396 = vld [vmem:[%s5 + $0x64] sm:$0xf]
    %v1397 = vld [vmem:[%s5 + $0x68] sm:$0xf]
    %v1398 = vld [vmem:[%s5 + $0x6c] sm:$0xf]
    %v1399 = vld [vmem:[%s5 + $0x70] sm:$0xf]
    %v1400 = vld [vmem:[%s5 + $0x74] sm:$0xf]
    %v1401 = vld [vmem:[%s5 + $0x78] sm:$0xf]
    %v1402 = vld [vmem:[%s5 + $0x7c] sm:$0xf]
    %v1403 = vld [vmem:[%s5 + $0x80] sm:$0xf]
    %v1404 = vld [vmem:[%s5 + $0x84] sm:$0xf]
    %v1405 = vld [vmem:[%s5 + $0x88] sm:$0xf]
    %v1406 = vld [vmem:[%s5 + $0x8c] sm:$0xf]
    %v1407 = vld [vmem:[%s5 + $0x90] sm:$0xf]
    %v1408 = vld [vmem:[%s5 + $0x94] sm:$0xf]
    %v1409 = vld [vmem:[%s5 + $0x98] sm:$0xf]
    %v1410 = vld [vmem:[%s5 + $0x9c] sm:$0xf]
    %v1411 = vld [vmem:[%s5 + $0xa0] sm:$0xf]
    %v1412 = vld [vmem:[%s5 + $0xa4] sm:$0xf]
    %v1413 = vld [vmem:[%s5 + $0xa8] sm:$0xf]
    %v1414 = vld [vmem:[%s5 + $0xac] sm:$0xf]
    %v1415 = vld [vmem:[%s5 + $0xb0] sm:$0xf]
    %v1416 = vld [vmem:[%s5 + $0xb4] sm:$0xf]
    %v1417 = vld [vmem:[%s5 + $0xb8] sm:$0xf]
    %v1418 = vld [vmem:[%s5 + $0xbc] sm:$0xf]
    %v1419 = vld [vmem:[%s5 + $0xc0] sm:$0xf]
    %v1420 = vld [vmem:[%s5 + $0xc4] sm:$0xf]
    %v1421 = vld [vmem:[%s5 + $0xc8] sm:$0xf]
    %v1422 = vld [vmem:[%s5 + $0xcc] sm:$0xf]
    %v1423 = vld [vmem:[%s5 + $0xd0] sm:$0xf]
    %v1424 = vld [vmem:[%s5 + $0xd4] sm:$0xf]
    %v1425 = vld [vmem:[%s5 + $0xd8] sm:$0xf]
    %v1426 = vld [vmem:[%s5 + $0xdc] sm:$0xf]
    %v1427 = vld [vmem:[%s5 + $0xe0] sm:$0xf]
    %v1428 = vld [vmem:[%s5 + $0xe4] sm:$0xf]
    %v1429 = vld [vmem:[%s5 + $0xe8] sm:$0xf]
    %v1430 = vld [vmem:[%s5 + $0xec] sm:$0xf]
    %v1431 = vld [vmem:[%s5 + $0xf0] sm:$0xf]
    %v1432 = vld [vmem:[%s5 + $0xf4] sm:$0xf]
    %v1433 = vld [vmem:[%s5 + $0xf8] sm:$0xf]
    %v1434 = vld [vmem:[%s5 + $0xfc] sm:$0xf]
    %v1435 = vld [vmem:[#allocation5] sm:$0x1]
    %v1437 = vlaneseq
    %v1438 = vshrl.u32 %v1437, 7
    %v1439 = vsub.s32 0, %v1438
    %v1440 = vrot.slane %v1435, %v1439
    %v1506 = vunpack.c.l.b16 %v1371
    %v1507 = vunpack.c.l.b16 %v1372
    %v1508 = vunpack.c.l.b16 %v1373
    %v1509 = vunpack.c.l.b16 %v1374
    %v1510 = vunpack.c.l.b16 %v1375
    %v1511 = vunpack.c.l.b16 %v1376
    %v1512 = vunpack.c.l.b16 %v1377
    %v1513 = vunpack.c.l.b16 %v1378
    %v1514 = vunpack.c.l.b16 %v1379
    %v1515 = vunpack.c.l.b16 %v1380
    %v1516 = vunpack.c.l.b16 %v1381
    %v1517 = vunpack.c.l.b16 %v1382
    %v1518 = vunpack.c.l.b16 %v1383
    %v1519 = vunpack.c.l.b16 %v1384
    %v1520 = vunpack.c.l.b16 %v1385
    %v1521 = vunpack.c.l.b16 %v1386
    %v1522 = vunpack.c.l.b16 %v1387
    %v1523 = vunpack.c.l.b16 %v1388
    %v1524 = vunpack.c.l.b16 %v1389
    %v1525 = vunpack.c.l.b16 %v1390
    %v1526 = vunpack.c.l.b16 %v1391
    %v1527 = vunpack.c.l.b16 %v1392
    %v1528 = vunpack.c.l.b16 %v1393
    %v1529 = vunpack.c.l.b16 %v1394
    %v1530 = vunpack.c.l.b16 %v1395
    %v1531 = vunpack.c.l.b16 %v1396
    %v1532 = vunpack.c.l.b16 %v1397
    %v1533 = vunpack.c.l.b16 %v1398
    %v1534 = vunpack.c.l.b16 %v1399
    %v1535 = vunpack.c.l.b16 %v1400
    %v1536 = vunpack.c.l.b16 %v1401
    %v1537 = vunpack.c.l.b16 %v1402
    %v1538 = vunpack.c.l.b16 %v1403
    %v1539 = vunpack.c.l.b16 %v1404
    %v1540 = vunpack.c.l.b16 %v1405
    %v1541 = vunpack.c.l.b16 %v1406
    %v1542 = vunpack.c.l.b16 %v1407
    %v1543 = vunpack.c.l.b16 %v1408
    %v1544 = vunpack.c.l.b16 %v1409
    %v1545 = vunpack.c.l.b16 %v1410
    %v1546 = vunpack.c.l.b16 %v1411
    %v1547 = vunpack.c.l.b16 %v1412
    %v1548 = vunpack.c.l.b16 %v1413
    %v1549 = vunpack.c.l.b16 %v1414
    %v1550 = vunpack.c.l.b16 %v1415
    %v1551 = vunpack.c.l.b16 %v1416
    %v1552 = vunpack.c.l.b16 %v1417
    %v1553 = vunpack.c.l.b16 %v1418
    %v1554 = vunpack.c.l.b16 %v1419
    %v1555 = vunpack.c.l.b16 %v1420
    %v1556 = vunpack.c.l.b16 %v1421
    %v1557 = vunpack.c.l.b16 %v1422
    %v1558 = vunpack.c.l.b16 %v1423
    %v1559 = vunpack.c.l.b16 %v1424
    %v1560 = vunpack.c.l.b16 %v1425
    %v1561 = vunpack.c.l.b16 %v1426
    %v1562 = vunpack.c.l.b16 %v1427
    %v1563 = vunpack.c.l.b16 %v1428
    %v1564 = vunpack.c.l.b16 %v1429
    %v1565 = vunpack.c.l.b16 %v1430
    %v1566 = vunpack.c.l.b16 %v1431
    %v1567 = vunpack.c.l.b16 %v1432
    %v1568 = vunpack.c.l.b16 %v1433
    %v1569 = vunpack.c.l.b16 %v1434
    %v1570 = vpack.c.b16 %v1507, %v1506
    %v1571 = vpack.c.b16 %v1509, %v1508
    %v1572 = vpack.c.b16 %v1511, %v1510
    %v1573 = vpack.c.b16 %v1513, %v1512
    %v1574 = vpack.c.b16 %v1515, %v1514
    %v1575 = vpack.c.b16 %v1517, %v1516
    %v1576 = vpack.c.b16 %v1519, %v1518
    %v1577 = vpack.c.b16 %v1521, %v1520
    %v1578 = vpack.c.b16 %v1523, %v1522
    %v1579 = vpack.c.b16 %v1525, %v1524
    %v1580 = vpack.c.b16 %v1527, %v1526
    %v1581 = vpack.c.b16 %v1529, %v1528
    %v1582 = vpack.c.b16 %v1531, %v1530
    %v1583 = vpack.c.b16 %v1533, %v1532
    %v1584 = vpack.c.b16 %v1535, %v1534
    %v1585 = vpack.c.b16 %v1537, %v1536
    %v1586 = vpack.c.b16 %v1539, %v1538
    %v1587 = vpack.c.b16 %v1541, %v1540
    %v1588 = vpack.c.b16 %v1543, %v1542
    %v1589 = vpack.c.b16 %v1545, %v1544
    %v1590 = vpack.c.b16 %v1547, %v1546
    %v1591 = vpack.c.b16 %v1549, %v1548
    %v1592 = vpack.c.b16 %v1551, %v1550
    %v1593 = vpack.c.b16 %v1553, %v1552
    %v1594 = vpack.c.b16 %v1555, %v1554
    %v1595 = vpack.c.b16 %v1557, %v1556
    %v1596 = vpack.c.b16 %v1559, %v1558
    %v1597 = vpack.c.b16 %v1561, %v1560
    %v1598 = vpack.c.b16 %v1563, %v1562
    %v1599 = vpack.c.b16 %v1565, %v1564
    %v1600 = vpack.c.b16 %v1567, %v1566
    %v1601 = vpack.c.b16 %v1569, %v1568
    %1634 = vmatprep.subr.bf16.mxu0 0
    %1635 = vmatpush1.bf16.msra.mxu0 %v1570
    %1636 = vmatprep.subr.bf16.mxu0 0
    %1637 = vmatpush1.bf16.msra.mxu0 %v1571
    %1638 = vmatprep.subr.bf16.mxu0 0
    %1639 = vmatpush1.bf16.msra.mxu0 %v1572
    %1640 = vmatprep.subr.bf16.mxu0 0
    %1641 = vmatpush1.bf16.msra.mxu0 %v1573
    %1642 = vmatprep.subr.bf16.mxu0 0
    %1643 = vmatpush1.bf16.msra.mxu0 %v1574
    %1644 = vmatprep.subr.bf16.mxu0 0
    %1645 = vmatpush1.bf16.msra.mxu0 %v1575
    %1646 = vmatprep.subr.bf16.mxu0 0
    %1647 = vmatpush1.bf16.msra.mxu0 %v1576
    %1648 = vmatprep.subr.bf16.mxu0 0
    %1649 = vmatpush1.bf16.msra.mxu0 %v1577
    %1650 = vmatprep.subr.bf16.mxu0 0
    %1651 = vmatpush1.bf16.msra.mxu0 %v1578
    %1652 = vmatprep.subr.bf16.mxu0 0
    %1653 = vmatpush1.bf16.msra.mxu0 %v1579
    %1654 = vmatprep.subr.bf16.mxu0 0
    %1655 = vmatpush1.bf16.msra.mxu0 %v1580
    %1656 = vmatprep.subr.bf16.mxu0 0
    %1657 = vmatpush1.bf16.msra.mxu0 %v1581
    %1658 = vmatprep.subr.bf16.mxu0 0
    %1659 = vmatpush1.bf16.msra.mxu0 %v1582
    %1660 = vmatprep.subr.bf16.mxu0 0
    %1661 = vmatpush1.bf16.msra.mxu0 %v1583
    %1662 = vmatprep.subr.bf16.mxu0 0
    %1663 = vmatpush1.bf16.msra.mxu0 %v1584
    %1664 = vmatprep.subr.bf16.mxu0 0
    %1665 = vmatpush1.bf16.msra.mxu0 %v1585
    %1666 = vmatprep.mubr.bf16.mxu0 %v1368
    %1667 = vmatmul.mubr.bf16.gmra.mrb[0].mxu0 %v1367
    %v1668 = vpop.f32.mrb[0].mxu0
    %v1669 = vadd.f32 %v1440, %v1668
    %v1670 = vpop.f32.mrb[0].mxu0
    %v1671 = vpop.f32.mrb[0].mxu0
    %v1672 = vpop.f32.mrb[0].mxu0
    %1673 = vdwg.mxu0
    %1674 = vmatprep.subr.bf16.mxu0 0
    %1675 = vmatpush1.bf16.msra.mxu0 %v1586
    %1676 = vmatprep.subr.bf16.mxu0 0
    %1677 = vmatpush1.bf16.msra.mxu0 %v1587
    %1678 = vmatprep.subr.bf16.mxu0 0
    %1679 = vmatpush1.bf16.msra.mxu0 %v1588
    %1680 = vmatprep.subr.bf16.mxu0 0
    %1681 = vmatpush1.bf16.msra.mxu0 %v1589
    %1682 = vmatprep.subr.bf16.mxu0 0
    %1683 = vmatpush1.bf16.msra.mxu0 %v1590
    %1684 = vmatprep.subr.bf16.mxu0 0
    %1685 = vmatpush1.bf16.msra.mxu0 %v1591
    %1686 = vmatprep.subr.bf16.mxu0 0
    %1687 = vmatpush1.bf16.msra.mxu0 %v1592
    %1688 = vmatprep.subr.bf16.mxu0 0
    %1689 = vmatpush1.bf16.msra.mxu0 %v1593
    %1690 = vmatprep.subr.bf16.mxu0 0
    %1691 = vmatpush1.bf16.msra.mxu0 %v1594
    %1692 = vmatprep.subr.bf16.mxu0 0
    %1693 = vmatpush1.bf16.msra.mxu0 %v1595
    %1694 = vmatprep.subr.bf16.mxu0 0
    %1695 = vmatpush1.bf16.msra.mxu0 %v1596
    %1696 = vmatprep.subr.bf16.mxu0 0
    %1697 = vmatpush1.bf16.msra.mxu0 %v1597
    %1698 = vmatprep.subr.bf16.mxu0 0
    %1699 = vmatpush1.bf16.msra.mxu0 %v1598
    %1700 = vmatprep.subr.bf16.mxu0 0
    %1701 = vmatpush1.bf16.msra.mxu0 %v1599
    %1702 = vmatprep.subr.bf16.mxu0 0
    %1703 = vmatpush1.bf16.msra.mxu0 %v1600
    %1704 = vmatprep.subr.bf16.mxu0 0
    %1705 = vmatpush1.bf16.msra.mxu0 %v1601
    %1706 = vmatprep.mubr.bf16.mxu0 %v1370
    %1707 = vmatmul.mubr.bf16.gmra.mrb[0].mxu0 %v1369
    %v1708 = vpop.f32.mrb[0].mxu0
    %v1709 = vadd.f32 %v1669, %v1708
    %v1710 = vpop.f32.mrb[0].mxu0
    %v1711 = vpop.f32.mrb[0].mxu0
    %v1712 = vpop.f32.mrb[0].mxu0
    %1713 = vdwg.mxu0
    %v1714 = vmax.f32 %v1709, 0.0
    %v1715 = vpack.c.bf16 %v1714, %v1714
    %v1716 = vld [vmem:[%s7] sm:$0xf]
    %v1717 = vld [vmem:[%s7 + $0x4] sm:$0xf]
    %v1718 = vld [vmem:[%s7 + $0x8] sm:$0xf]
    %v1719 = vld [vmem:[%s7 + $0xc] sm:$0xf]
    %v1720 = vld [vmem:[%s7 + $0x10] sm:$0xf]
    %v1721 = vld [vmem:[%s7 + $0x14] sm:$0xf]
    %v1722 = vld [vmem:[%s7 + $0x18] sm:$0xf]
    %v1723 = vld [vmem:[%s7 + $0x1c] sm:$0xf]
    %v1724 = vld [vmem:[%s7 + $0x20] sm:$0xf]
    %v1725 = vld [vmem:[%s7 + $0x24] sm:$0xf]
    %v1726 = vld [vmem:[%s7 + $0x28] sm:$0xf]
    %v1727 = vld [vmem:[%s7 + $0x2c] sm:$0xf]
    %v1728 = vld [vmem:[%s7 + $0x30] sm:$0xf]
    %v1729 = vld [vmem:[%s7 + $0x34] sm:$0xf]
    %v1730 = vld [vmem:[%s7 + $0x38] sm:$0xf]
    %v1731 = vld [vmem:[%s7 + $0x3c] sm:$0xf]
    %v1732 = vld [vmem:[#allocation7] sm:$0x1]
    %v1734 = vlaneseq
    %v1735 = vshrl.u32 %v1734, 7
    %v1736 = vsub.s32 0, %v1735
    %v1737 = vrot.slane %v1732, %v1736
    %v1755 = vunpack.c.l.b16 %v1716
    %v1756 = vunpack.c.l.b16 %v1717
    %v1757 = vunpack.c.l.b16 %v1718
    %v1758 = vunpack.c.l.b16 %v1719
    %v1759 = vunpack.c.l.b16 %v1720
    %v1760 = vunpack.c.l.b16 %v1721
    %v1761 = vunpack.c.l.b16 %v1722
    %v1762 = vunpack.c.l.b16 %v1723
    %v1763 = vunpack.c.l.b16 %v1724
    %v1764 = vunpack.c.l.b16 %v1725
    %v1765 = vunpack.c.l.b16 %v1726
    %v1766 = vunpack.c.l.b16 %v1727
    %v1767 = vunpack.c.l.b16 %v1728
    %v1768 = vunpack.c.l.b16 %v1729
    %v1769 = vunpack.c.l.b16 %v1730
    %v1770 = vunpack.c.l.b16 %v1731
    %v1771 = vpack.c.b16 %v1756, %v1755
    %v1772 = vpack.c.b16 %v1758, %v1757
    %v1773 = vpack.c.b16 %v1760, %v1759
    %v1774 = vpack.c.b16 %v1762, %v1761
    %v1775 = vpack.c.b16 %v1764, %v1763
    %v1776 = vpack.c.b16 %v1766, %v1765
    %v1777 = vpack.c.b16 %v1768, %v1767
    %v1778 = vpack.c.b16 %v1770, %v1769
    %1787 = vmatprep.subr.bf16.mxu0 0
    %1788 = vmatpush1.bf16.msra.mxu0 %v1771
    %1789 = vmatprep.subr.bf16.mxu0 0
    %1790 = vmatpush1.bf16.msra.mxu0 %v1772
    %1791 = vmatprep.subr.bf16.mxu0 0
    %1792 = vmatpush1.bf16.msra.mxu0 %v1773
    %1793 = vmatprep.subr.bf16.mxu0 0
    %1794 = vmatpush1.bf16.msra.mxu0 %v1774
    %1795 = vmatprep.subr.bf16.mxu0 0
    %1796 = vmatpush1.bf16.msra.mxu0 %v1775
    %1797 = vmatprep.subr.bf16.mxu0 0
    %1798 = vmatpush1.bf16.msra.mxu0 %v1776
    %1799 = vmatprep.subr.bf16.mxu0 0
    %1800 = vmatpush1.bf16.msra.mxu0 %v1777
    %1801 = vmatprep.subr.bf16.mxu0 0
    %1802 = vmatpush1.bf16.msra.mxu0 %v1778
    %1803 = vmatprep.subr.bf16.mxu0 0
    %1804 = vmatpush1.bf16.msra.mxu0 0
    %1805 = vmatprep.subr.bf16.mxu0 0
    %1806 = vmatpush1.bf16.msra.mxu0 0
    %1807 = vmatprep.subr.bf16.mxu0 0
    %1808 = vmatpush1.bf16.msra.mxu0 0
    %1809 = vmatprep.subr.bf16.mxu0 0
    %1810 = vmatpush1.bf16.msra.mxu0 0
    %1811 = vmatprep.subr.bf16.mxu0 0
    %1812 = vmatpush1.bf16.msra.mxu0 0
    %1813 = vmatprep.subr.bf16.mxu0 0
    %1814 = vmatpush1.bf16.msra.mxu0 0
    %1815 = vmatprep.subr.bf16.mxu0 0
    %1816 = vmatpush1.bf16.msra.mxu0 0
    %1817 = vmatprep.subr.bf16.mxu0 0
    %1818 = vmatpush1.bf16.msra.mxu0 0
    %1819 = vmatprep.mubr.bf16.mxu0 0
    %1820 = vmatmul.mubr.bf16.gmra.mrb[0].mxu0 %v1715
    %v1821 = vpop.f32.mrb[0].mxu0
    %v1822 = vadd.f32 %v1737, %v1821
    %v1823 = vpop.f32.mrb[0].mxu0
    %v1824 = vpop.f32.mrb[0].mxu0
    %v1825 = vpop.f32.mrb[0].mxu0
    %1826 = vdwg.mxu0
    %1827 = vst [vmem:[#allocation8] sm:$0x3] %v1822
    // Predicated region
    $region50: #{forward.1} parent=1 // pred_check
      _
    $region51: #{forward.1} parent=1 // pred_check_branch
      %1829 = sbr.rel (0) target = $region53
    $region52: #{forward.1} parent=1 // pred_region
      %s1831 = ssub.s32 32, 32
      %1832 = vsyncadd [#allocation4], %s1831
      %s1834 = sshll.u32 [#allocation8], 4
      %s1835 = int_to_ptr.vmem [resolvable:$true] %s1834
      %1837 = dma.vmem_to_hbm [thread:$0]  %s1835, 32, %s9, [#allocation4]
    $region53: #{forward.1} parent=1 // pred_fallthru
      _
    // Predicated region
    $region54: #{forward.1} parent=1 // pred_check
      _
    $region55: #{forward.1} parent=1 // pred_check_branch
      %1839 = sbr.rel (0) target = $region57
    $region56: #{forward.1} parent=1 // pred_region
      %1840 = dma.done [#allocation4], 32
    $region57: #{forward.1} parent=1 // pred_fallthru
      _
    %1841 = vsyncpa [#allocation3], 1
    %1842 = vsyncpa [#allocation6], 1
    %1843 = vsyncpa [#allocation4], 1

</llo_original>
